<compile_context>
chip_gen: v7x
topology: tpu7x:2x2x1
jax: 0.10.0
libtpu: 0.0.40
codegen_flags: <defaults>
</compile_context>

<pallas_src>
import functools
import math

import jax
import jax.numpy as jnp
from jax.experimental import pallas as pl
from jax.experimental.pallas import tpu as pltpu


# ----------------------------- helpers -----------------------------

def _tile(dim, cap):
    t = min(cap, dim)
    assert dim % t == 0, f"dim {dim} not divisible by tile {t}"
    return t


# ----------------------------- Pallas kernels -----------------------------

def _rms_matmul_kernel(x_ref, g_ref, w_ref, o_ref, *, eps):
    # Fused RMSNorm (f32) + projection (bf16 MXU, f32 accumulate).
    x = x_ref[...].astype(jnp.float32)
    var = jnp.mean(x * x, axis=-1, keepdims=True)
    xn = (x * jax.lax.rsqrt(var + eps)) * g_ref[...].astype(jnp.float32)
    o_ref[...] = jnp.dot(xn.astype(jnp.bfloat16), w_ref[...],
                         preferred_element_type=jnp.float32).astype(o_ref.dtype)


def rms_matmul(x, gamma, w, eps, *, out_dtype=jnp.bfloat16, tm=128, tn=128):
    M, K = x.shape
    N = w.shape[1]
    tm = _tile(M, tm)
    tn = _tile(N, tn)
    return pl.pallas_call(
        functools.partial(_rms_matmul_kernel, eps=eps),
        out_shape=jax.ShapeDtypeStruct((M, N), out_dtype),
        grid=(M // tm, N // tn),
        in_specs=[pl.BlockSpec((tm, K), lambda i, j: (i, 0)),
                  pl.BlockSpec((1, K), lambda i, j: (0, 0)),
                  pl.BlockSpec((K, tn), lambda i, j: (0, j))],
        out_specs=pl.BlockSpec((tm, tn), lambda i, j: (i, j)),
        compiler_params=pltpu.CompilerParams(
            dimension_semantics=("parallel", "parallel")),
    )(x, gamma.reshape(1, K).astype(jnp.float32), w)


def _matmul_res_kernel(x_ref, w_ref, res_ref, o_ref, acc_ref):
    # (M,N,K)-tiled matmul with f32 VMEM accumulator and fused residual add.
    @pl.when(pl.program_id(2) == 0)
    def _():
        acc_ref[...] = jnp.zeros_like(acc_ref)

    acc_ref[...] += jnp.dot(x_ref[...], w_ref[...],
                            preferred_element_type=jnp.float32)

    @pl.when(pl.program_id(2) == pl.num_programs(2) - 1)
    def _():
        o_ref[...] = (acc_ref[...] + res_ref[...].astype(jnp.float32)
                      ).astype(o_ref.dtype)


def matmul_residual(x, w, res, *, out_dtype=jnp.float32, tm=128, tn=128, tk=128):
    M, K = x.shape
    N = w.shape[1]
    tm = _tile(M, tm)
    tn = _tile(N, tn)
    tk = _tile(K, tk)
    return pl.pallas_call(
        _matmul_res_kernel,
        out_shape=jax.ShapeDtypeStruct((M, N), out_dtype),
        grid=(M // tm, N // tn, K // tk),
        in_specs=[pl.BlockSpec((tm, tk), lambda i, j, k: (i, k)),
                  pl.BlockSpec((tk, tn), lambda i, j, k: (k, j)),
                  pl.BlockSpec((tm, tn), lambda i, j, k: (i, j))],
        out_specs=pl.BlockSpec((tm, tn), lambda i, j, k: (i, j)),
        scratch_shapes=[pltpu.VMEM((tm, tn), jnp.float32)],
        compiler_params=pltpu.CompilerParams(
            dimension_semantics=("parallel", "parallel", "arbitrary")),
    )(x, w, res)


def _gated_mlp_kernel(x_ref, wg_ref, wu_ref, wd_ref, o_ref, acc_ref):
    # Gated SiLU MLP, accumulated over intermediate-dim tiles.
    i = pl.program_id(1)

    @pl.when(i == 0)
    def _():
        acc_ref[...] = jnp.zeros_like(acc_ref)

    x = x_ref[...]                                               # bf16 (tm, H)
    g = jnp.dot(x, wg_ref[...], preferred_element_type=jnp.float32)
    u = jnp.dot(x, wu_ref[...], preferred_element_type=jnp.float32)
    h = (g * jax.nn.sigmoid(g)) * u                              # SiLU in f32
    acc_ref[...] += jnp.dot(h.astype(jnp.bfloat16), wd_ref[...],
                            preferred_element_type=jnp.float32)

    @pl.when(i == pl.num_programs(1) - 1)
    def _():
        o_ref[...] = acc_ref[...].astype(o_ref.dtype)


def gated_mlp(x, wg, wu, wd, *, out_dtype=jnp.bfloat16, tm=128, ti=256):
    M, H = x.shape
    I = wg.shape[1]
    O = wd.shape[1]
    tm = _tile(M, tm)
    ti = _tile(I, ti)
    return pl.pallas_call(
        _gated_mlp_kernel,
        out_shape=jax.ShapeDtypeStruct((M, O), out_dtype),
        grid=(M // tm, I // ti),
        in_specs=[pl.BlockSpec((tm, H), lambda m, i: (m, 0)),
                  pl.BlockSpec((H, ti), lambda m, i: (0, i)),
                  pl.BlockSpec((H, ti), lambda m, i: (0, i)),
                  pl.BlockSpec((ti, O), lambda m, i: (i, 0))],
        out_specs=pl.BlockSpec((tm, O), lambda m, i: (m, 0)),
        scratch_shapes=[pltpu.VMEM((tm, O), jnp.float32)],
        compiler_params=pltpu.CompilerParams(
            dimension_semantics=("parallel", "arbitrary")),
    )(x, wg, wu, wd)


def _rms_gated_mlp_kernel(x_ref, g_ref, wg_ref, wu_ref, wd_ref, res_ref,
                          o_ref, acc_ref, *, eps):
    # Fused: RMSNorm(x) -> gated SiLU MLP (accumulated over I tiles) -> +residual.
    i = pl.program_id(1)

    @pl.when(i == 0)
    def _():
        acc_ref[...] = jnp.zeros_like(acc_ref)

    x = x_ref[...].astype(jnp.float32)
    var = jnp.mean(x * x, axis=-1, keepdims=True)
    xn = ((x * jax.lax.rsqrt(var + eps)) *
          g_ref[...].astype(jnp.float32)).astype(jnp.bfloat16)
    g = jnp.dot(xn, wg_ref[...], preferred_element_type=jnp.float32)
    u = jnp.dot(xn, wu_ref[...], preferred_element_type=jnp.float32)
    h = (g * jax.nn.sigmoid(g)) * u
    acc_ref[...] += jnp.dot(h.astype(jnp.bfloat16), wd_ref[...],
                            preferred_element_type=jnp.float32)

    @pl.when(i == pl.num_programs(1) - 1)
    def _():
        o_ref[...] = (acc_ref[...] + res_ref[...].astype(jnp.float32)
                      ).astype(o_ref.dtype)


def rms_gated_mlp_residual(x, gamma, wg, wu, wd, res, eps, *,
                           out_dtype=jnp.float32, tm=128, ti=256):
    M, H = x.shape
    I = wg.shape[1]
    O = wd.shape[1]
    tm = _tile(M, tm)
    ti = _tile(I, ti)
    return pl.pallas_call(
        functools.partial(_rms_gated_mlp_kernel, eps=eps),
        out_shape=jax.ShapeDtypeStruct((M, O), out_dtype),
        grid=(M // tm, I // ti),
        in_specs=[pl.BlockSpec((tm, H), lambda m, i: (m, 0)),
                  pl.BlockSpec((1, H), lambda m, i: (0, 0)),
                  pl.BlockSpec((H, ti), lambda m, i: (0, i)),
                  pl.BlockSpec((H, ti), lambda m, i: (0, i)),
                  pl.BlockSpec((ti, O), lambda m, i: (i, 0)),
                  pl.BlockSpec((tm, O), lambda m, i: (m, 0))],
        out_specs=pl.BlockSpec((tm, O), lambda m, i: (m, 0)),
        scratch_shapes=[pltpu.VMEM((tm, O), jnp.float32)],
        compiler_params=pltpu.CompilerParams(
            dimension_semantics=("parallel", "arbitrary")),
    )(x, gamma.reshape(1, H).astype(jnp.float32), wg, wu, wd, res)


def _attn_kernel(q_ref, kv_ref, m_ref, o_ref, *, scale, groups, head_dim):
    # One (batch, kv_head) tile: `groups` query heads share this K/V block, so
    # K/V are DMA'd once per KV head instead of once per query head.
    kv = kv_ref[...][0]                              # (KV, 2*hd) bf16, [k | v]
    k = kv[:, :head_dim]                             # (KV, hd)
    v = kv[:, head_dim:]                             # (KV, hd)
    q_all = q_ref[...][0]                            # (L, groups*hd) bf16
    mask = m_ref[...][0]                             # (1, KV) f32, 1=attend
    # Additive mask built in-kernel; -1e30 instead of finfo.min to avoid
    # -inf saturation after adding scaled scores.
    bias = jnp.where(mask > 0.5, 0.0, -1e30)

    for g in range(groups):                          # static unroll over query heads
        q = q_all[:, g * head_dim:(g + 1) * head_dim]          # (L, hd)
        s = jax.lax.dot_general(q, k, (((1,), (1,)), ((), ())),
                                preferred_element_type=jnp.float32)
        s = s * scale + bias                                   # (L, KV) f32
        s = s - jnp.max(s, axis=-1, keepdims=True)
        p = jnp.exp(s)                                         # softmax in f32
        p = p * pl.reciprocal(jnp.sum(p, axis=-1, keepdims=True), approx=True)
        o = jnp.dot(p.astype(v.dtype), v, preferred_element_type=jnp.float32)
        o_ref[0, :, g * head_dim:(g + 1) * head_dim] = o.astype(o_ref.dtype)


def attention(q, kv, mask, *, num_kv_heads, groups, head_dim, scale):
    # q:    (B, L, nh*hd)          bf16, head-major columns
    # kv:   (B, KV, 2*nkv*hd)      bf16, per-KV-head interleaved [k_h | v_h]
    # mask: (B, 1, KV)             f32, 1.0 = attend / 0.0 = masked
    B, L, QD = q.shape
    KV = kv.shape[1]
    return pl.pallas_call(
        functools.partial(_attn_kernel, scale=scale, groups=groups,
                          head_dim=head_dim),
        out_shape=jax.ShapeDtypeStruct((B, L, QD), jnp.bfloat16),
        grid=(B, num_kv_heads),
        in_specs=[
            pl.BlockSpec((1, L, groups * head_dim), lambda b, g: (b, 0, g)),
            pl.BlockSpec((1, KV, 2 * head_dim), lambda b, g: (b, 0, g)),
            pl.BlockSpec((1, 1, KV), lambda b, g: (b, 0, 0)),
        ],
        out_specs=pl.BlockSpec((1, L, groups * head_dim), lambda b, g: (b, 0, g)),
        compiler_params=pltpu.CompilerParams(
            dimension_semantics=("parallel", "parallel")),
    )(q, kv, mask)


def _rmsnorm_kernel(x_ref, g_ref, o_ref, *, eps):
    x = x_ref[...].astype(jnp.float32)
    var = jnp.mean(x * x, axis=-1, keepdims=True)
    o_ref[...] = (x * jax.lax.rsqrt(var + eps) *
                  g_ref[...].astype(jnp.float32)).astype(o_ref.dtype)


def rmsnorm(x, gamma, eps, *, out_dtype=jnp.float32, tm=128):
    M, H = x.shape
    tm = _tile(M, tm)
    return pl.pallas_call(
        functools.partial(_rmsnorm_kernel, eps=eps),
        out_shape=jax.ShapeDtypeStruct((M, H), out_dtype),
        grid=(M // tm,),
        in_specs=[pl.BlockSpec((tm, H), lambda i: (i, 0)),
                  pl.BlockSpec((1, H), lambda i: (0, 0))],
        out_specs=pl.BlockSpec((tm, H), lambda i: (i, 0)),
        compiler_params=pltpu.CompilerParams(dimension_semantics=("parallel",)),
    )(x, gamma.reshape(1, H).astype(jnp.float32))


# ----------------------------- parameters -----------------------------

def init_params(key, cfg):
    def lin(k, fan_in, fan_out):
        return (0.02 * jax.random.normal(k, (fan_in, fan_out),
                                         dtype=jnp.float32)).astype(jnp.bfloat16)

    keys = jax.random.split(key, 64)
    ki = iter(range(64))
    Hv, Ht, It = cfg["vision_hidden"], cfg["text_hidden"], cfg["text_intermediate"]
    nh, nkv, hd = cfg["num_heads"], cfg["num_kv_heads"], cfg["head_dim"]

    params = {
        # modality projection MLP: vision_hidden -> text_intermediate -> text_hidden
        "mp_gate": lin(keys[next(ki)], Hv, It),
        "mp_up": lin(keys[next(ki)], Hv, It),
        "mp_down": lin(keys[next(ki)], It, Ht),
        # perceiver latents: torch.ones(n_latents, hidden)
        "latents": jnp.ones((cfg["n_latents"], Ht), dtype=jnp.float32),
        "final_norm": jnp.ones((Ht,), dtype=jnp.float32),
        "layers": [],
    }
    for _ in range(cfg["depth"]):
        wq = lin(keys[next(ki)], Ht, nh * hd)
        wk = lin(keys[next(ki)], Ht, nkv * hd)
        wv = lin(keys[next(ki)], Ht, nkv * hd)
        # Per-KV-head interleaved K/V projection: columns [k_h | v_h] per head h,
        # so the attention BlockSpec can grab one head's K and V as one chunk.
        w_kv = jnp.stack([wk.reshape(Ht, nkv, hd), wv.reshape(Ht, nkv, hd)],
                         axis=2).reshape(Ht, 2 * nkv * hd)
        # Latents pass through both the q-projection and the kv-projection; fuse
        # them so the latents RMSNorm+matmul is done once.
        w_lat = jnp.concatenate([wq, w_kv], axis=1)
        layer = {
            "ln_latents": jnp.ones((Ht,), dtype=jnp.float32),
            "ln_context": jnp.ones((Ht,), dtype=jnp.float32),
            "ln_post": jnp.ones((Ht,), dtype=jnp.float32),
            "w_lat": w_lat,                     # (Ht, nh*hd + 2*nkv*hd)
            "w_kv": w_kv,                       # (Ht, 2*nkv*hd)
            "wo": lin(keys[next(ki)], nh * hd, Ht),
            # per-layer MLP: hidden -> 4*hidden -> hidden
            "mlp_gate": lin(keys[next(ki)], Ht, 4 * Ht),
            "mlp_up": lin(keys[next(ki)], Ht, 4 * Ht),
            "mlp_down": lin(keys[next(ki)], 4 * Ht, Ht),
        }
        params["layers"].append(layer)
    return params


# ----------------------------- model wrapper -----------------------------

def idefics2_connector(params, image_hidden_states, attention_mask, cfg):
    B, S, Hv = image_hidden_states.shape
    Ht = cfg["text_hidden"]
    n_lat = cfg["n_latents"]
    nh, nkv, hd = cfg["num_heads"], cfg["num_kv_heads"], cfg["head_dim"]
    groups = nh // nkv
    scale = 1.0 / math.sqrt(hd)
    eps = cfg["eps"]
    kv_len = S + n_lat
    q_dim = nh * hd
    kv_dim = 2 * nkv * hd

    # ---- modality projection (gated SiLU MLP), bf16 activations ----
    x = image_hidden_states.reshape(B * S, Hv).astype(jnp.bfloat16)
    context = gated_mlp(x, params["mp_gate"], params["mp_up"], params["mp_down"],
                        out_dtype=jnp.bfloat16)                  # (B*S, Ht)

    # ---- perceiver resampler ----
    latents = jnp.broadcast_to(params["latents"][None],
                               (B, n_lat, Ht)).reshape(B * n_lat, Ht)

    # mask = cat([attention_mask, ones(B, n_latents)]); the additive 4-D mask is
    # never materialized -- only a (B, 1, KV) 0/1 row goes to the attention kernel.
    lat_mask = jnp.ones((B, n_lat), dtype=attention_mask.dtype)
    mask = jnp.concatenate([attention_mask, lat_mask], axis=-1)
    mask = mask.astype(jnp.float32).reshape(B, 1, kv_len)

    for layer in params["layers"]:
        # -- cross-attention block --
        # Fused RMSNorm + projections (latents -> [q | kv], context -> kv).
        q_kv_lat = rms_matmul(latents, layer["ln_latents"], layer["w_lat"], eps)
        kv_ctx = rms_matmul(context, layer["ln_context"], layer["w_kv"], eps)

        q = q_kv_lat[:, :q_dim].reshape(B, n_lat, q_dim)
        kv_lat = q_kv_lat[:, q_dim:].reshape(B, n_lat, kv_dim)
        # KV sequence order matches the mask: [context, latents].
        kv = jnp.concatenate([kv_ctx.reshape(B, S, kv_dim), kv_lat], axis=1)

        attn = attention(q, kv, mask, num_kv_heads=nkv, groups=groups,
                         head_dim=hd, scale=scale)               # (B, n_lat, nh*hd)

        # o-projection with fused residual add (residual = latents, f32 stream).
        latents = matmul_residual(attn.reshape(B * n_lat, q_dim), layer["wo"],
                                  latents, out_dtype=jnp.float32)

        # -- MLP block: post-attn RMSNorm + gated MLP + residual, all fused --
        latents = rms_gated_mlp_residual(
            latents, layer["ln_post"], layer["mlp_gate"], layer["mlp_up"],
            layer["mlp_down"], latents, eps, out_dtype=jnp.float32)

    out = rmsnorm(latents, params["final_norm"], eps, out_dtype=jnp.float32)
    return out.reshape(B, n_lat, Ht)


# ----------------------------- main -----------------------------

if __name__ == "__main__":
    # Small but TPU-friendly shapes (feature dims multiples of 128 so all stores
    # are lane-dense and tiling is exercised).  Real Idefics2 sizes just change
    # the tile caps (re-derive for v7x's 64 MiB VMEM).
    cfg = {
        "vision_hidden": 256,
        "text_hidden": 256,
        "text_intermediate": 512,
        "n_latents": 64,
        "depth": 2,
        "num_heads": 4,
        "num_kv_heads": 2,
        "head_dim": 64,
        "eps": 1e-6,
    }
    B, S = 2, 64

    key = jax.random.PRNGKey(0)
    k_params, k_x = jax.random.split(key)
    params = init_params(k_params, cfg)

    image_hidden_states = jax.random.normal(
        k_x, (B, S, cfg["vision_hidden"]), dtype=jnp.float32)
    # deterministic attention mask: batch 1 has the last 7 context tokens masked
    attention_mask = jnp.ones((B, S), dtype=jnp.int32)
    attention_mask = attention_mask.at[1, S - 7:].set(0)

    out = idefics2_connector(params, image_hidden_states, attention_mask, cfg)
    out = jax.block_until_ready(out)

    assert out.shape == (B, cfg["n_latents"], cfg["text_hidden"])
    assert bool(jnp.all(jnp.isfinite(out)))
    print("KERNEL_OK")
</pallas_src>

<mosaic_0001>
module attributes {stable_mosaic.version = 11 : i64} {
  func.func @_gated_mlp_kernel(%arg0: i32, %arg1: i32, %arg2: memref<128x256xbf16, #tpu.memory_space<vmem>>, %arg3: memref<256x256xbf16, #tpu.memory_space<vmem>>, %arg4: memref<256x256xbf16, #tpu.memory_space<vmem>>, %arg5: memref<256x256xbf16, #tpu.memory_space<vmem>>, %arg6: memref<128x256xbf16, #tpu.memory_space<vmem>>, %arg7: memref<128x256xf32, #tpu.memory_space<vmem>>) attributes {dimension_semantics = [#tpu.dimension_semantics<parallel>, #tpu.dimension_semantics<arbitrary>], iteration_bounds = array<i64: 1, 2>, scalar_prefetch = 0 : i64, scratch_operands = 1 : i64, tpu.core_type = #tpu.core_type<tc>, window_params = [{transform_indices = @transform_0, window_bounds = array<i64: 128, 256>}, {transform_indices = @transform_1, window_bounds = array<i64: 256, 256>}, {transform_indices = @transform_2, window_bounds = array<i64: 256, 256>}, {transform_indices = @transform_3, window_bounds = array<i64: 256, 256>}, {transform_indices = @transform_4, window_bounds = array<i64: 128, 256>}]} {
    %c0_i32 = arith.constant 0 : i32
    %0 = arith.cmpi eq, %arg1, %c0_i32 : i32
    %1 = arith.extui %0 : i1 to i32
    %c0_i32_0 = arith.constant 0 : i32
    %2 = arith.cmpi ne, %1, %c0_i32_0 : i32
    scf.if %2 {
      %cst_16 = arith.constant 0.000000e+00 : f32
      %24 = vector.broadcast %cst_16 : f32 to vector<128x256xf32>
      %c0_17 = arith.constant 0 : index
      %c0_18 = arith.constant 0 : index
      %25 = vector.load %arg7[%c0_17, %c0_18] : memref<128x256xf32, #tpu.memory_space<vmem>>, vector<128x256xf32>
      tpu.vector_store %arg7[%c0_17, %c0_18], %24 {strides = array<i32>} : memref<128x256xf32, #tpu.memory_space<vmem>>, vector<128x256xf32>,
    } else {
    }
    %c0 = arith.constant 0 : index
    %c0_1 = arith.constant 0 : index
    %3 = vector.load %arg2[%c0, %c0_1] : memref<128x256xbf16, #tpu.memory_space<vmem>>, vector<128x256xbf16>
    %c0_2 = arith.constant 0 : index
    %c0_3 = arith.constant 0 : index
    %4 = vector.load %arg3[%c0_2, %c0_3] : memref<256x256xbf16, #tpu.memory_space<vmem>>, vector<256x256xbf16>
    %cst = arith.constant dense<0.000000e+00> : vector<128x256xf32>
    %5 = tpu.matmul %3, %4, %cst {dimension_numbers = #tpu.dot_dimension_numbers<[1], [0], [0], [1], [0, 0, 1, 1], [], []>} : vector<128x256xbf16>, vector<256x256xbf16>, vector<128x256xf32> -> vector<128x256xf32>
    %c0_4 = arith.constant 0 : index
    %c0_5 = arith.constant 0 : index
    %6 = vector.load %arg4[%c0_4, %c0_5] : memref<256x256xbf16, #tpu.memory_space<vmem>>, vector<256x256xbf16>
    %cst_6 = arith.constant dense<0.000000e+00> : vector<128x256xf32>
    %7 = tpu.matmul %3, %6, %cst_6 {dimension_numbers = #tpu.dot_dimension_numbers<[1], [0], [0], [1], [0, 0, 1, 1], [], []>} : vector<128x256xbf16>, vector<256x256xbf16>, vector<128x256xf32> -> vector<128x256xf32>
    %8 = arith.negf %5 : vector<128x256xf32>
    %9 = math.exp %8 : vector<128x256xf32>
    %cst_7 = arith.constant 1.000000e+00 : f32
    %10 = vector.broadcast %cst_7 : f32 to vector<128x256xf32>
    %11 = arith.addf %10, %9 : vector<128x256xf32>
    %12 = arith.divf %10, %11 : vector<128x256xf32>
    %13 = arith.mulf %5, %12 : vector<128x256xf32>
    %14 = arith.mulf %13, %7 : vector<128x256xf32>
    %c0_8 = arith.constant 0 : index
    %c0_9 = arith.constant 0 : index
    %15 = vector.load %arg7[%c0_8, %c0_9] : memref<128x256xf32, #tpu.memory_space<vmem>>, vector<128x256xf32>
    %16 = arith.truncf %14 : vector<128x256xf32> to vector<128x256xbf16>
    %c0_10 = arith.constant 0 : index
    %c0_11 = arith.constant 0 : index
    %17 = vector.load %arg5[%c0_10, %c0_11] : memref<256x256xbf16, #tpu.memory_space<vmem>>, vector<256x256xbf16>
    %cst_12 = arith.constant dense<0.000000e+00> : vector<128x256xf32>
    %18 = tpu.matmul %16, %17, %cst_12 {dimension_numbers = #tpu.dot_dimension_numbers<[1], [0], [0], [1], [0, 0, 1, 1], [], []>} : vector<128x256xbf16>, vector<256x256xbf16>, vector<128x256xf32> -> vector<128x256xf32>
    %19 = arith.addf %15, %18 : vector<128x256xf32>
    %c0_13 = arith.constant 0 : index
    %c0_14 = arith.constant 0 : index
    %20 = vector.load %arg7[%c0_13, %c0_14] : memref<128x256xf32, #tpu.memory_space<vmem>>, vector<128x256xf32>
    tpu.vector_store %arg7[%c0_13, %c0_14], %19 {strides = array<i32>} : memref<128x256xf32, #tpu.memory_space<vmem>>, vector<128x256xf32>,
    %c1_i32 = arith.constant 1 : i32
    %21 = arith.cmpi eq, %arg1, %c1_i32 : i32
    %22 = arith.extui %21 : i1 to i32
    %c0_i32_15 = arith.constant 0 : i32
    %23 = arith.cmpi ne, %22, %c0_i32_15 : i32
    scf.if %23 {
      %c0_16 = arith.constant 0 : index
      %c0_17 = arith.constant 0 : index
      %24 = vector.load %arg7[%c0_16, %c0_17] : memref<128x256xf32, #tpu.memory_space<vmem>>, vector<128x256xf32>
      %25 = arith.truncf %24 : vector<128x256xf32> to vector<128x256xbf16>
      %c0_18 = arith.constant 0 : index
      %c0_19 = arith.constant 0 : index
      %26 = vector.load %arg6[%c0_18, %c0_19] : memref<128x256xbf16, #tpu.memory_space<vmem>>, vector<128x256xbf16>
      tpu.vector_store %arg6[%c0_18, %c0_19], %25 {strides = array<i32>} : memref<128x256xbf16, #tpu.memory_space<vmem>>, vector<128x256xbf16>,
    } else {
    }
    return
  }
  func.func @transform_0(%arg0: i32, %arg1: i32) -> (i32, i32) {
    %c0_i32 = arith.constant 0 : i32
    %c0_i32_0 = arith.constant 0 : i32
    return %arg0, %c0_i32 : i32, i32
  }
  func.func @transform_1(%arg0: i32, %arg1: i32) -> (i32, i32) {
    %c0_i32 = arith.constant 0 : i32
    %c0_i32_0 = arith.constant 0 : i32
    return %c0_i32, %arg1 : i32, i32
  }
  func.func @transform_2(%arg0: i32, %arg1: i32) -> (i32, i32) {
    %c0_i32 = arith.constant 0 : i32
    %c0_i32_0 = arith.constant 0 : i32
    return %c0_i32, %arg1 : i32, i32
  }
  func.func @transform_3(%arg0: i32, %arg1: i32) -> (i32, i32) {
    %c0_i32 = arith.constant 0 : i32
    %c0_i32_0 = arith.constant 0 : i32
    return %arg1, %c0_i32 : i32, i32
  }
  func.func @transform_4(%arg0: i32, %arg1: i32) -> (i32, i32) {
    %c0_i32 = arith.constant 0 : i32
    %c0_i32_0 = arith.constant 0 : i32
    return %arg0, %c0_i32 : i32, i32
  }
}

</mosaic_0001>

<llo_original>
// kernel: tpu_custom_call.1
$region0: #{tpu_custom_call.1}
  #allocation0 [shape = 'u32[]', space=smem, size = 0x4, offset = 0x4, fixed_abs, tag = 'smem constant byte address 0x4 - core index']
  #allocation1 [shape = 'u32[144,128]{1,0:T(1,128)}', space=vmem, size = 0x12000, scoped, tag = 'internal scratch']
  #allocation2 [shape = 'f32[128,256]{1,0:T(8,128)}', space=vmem, size = 0x20000, scoped, tag = 'scratch operand']
  %s0 = inlined_call_operand.hbm [shape: bf16[128,256], index: 0, kind: input, shape index: {}]
  %s1 = inlined_call_operand.hbm [shape: bf16[256,512], index: 1, kind: input, shape index: {}]
  %s2 = inlined_call_operand.hbm [shape: bf16[256,512], index: 2, kind: input, shape index: {}]
  %s3 = inlined_call_operand.hbm [shape: bf16[512,256], index: 3, kind: input, shape index: {}]
  %s4 = inlined_call_operand.hbm [shape: bf16[128,256], index: 4, kind: output, shape index: {}]
  %s5 = sld [smem:[#allocation0]]
  $region73: #{tpu_custom_call.1} parent=0
    _
  %s7 = ssub.s32 1, %s5
  %s8 = scalar_select 0, %s7, %s5
  $region1: #{tpu_custom_call.1} parent=0
    #allocation3 [shape = 'u8[65536]{0}', space=vmem, size = 0x10000, scoped, tag = 'input window, operand 0, single buffered']
    #allocation4 [shape = 's32[2]{0}', space=sflag, size = 0x8, scoped, tag = 'scoped memory for tpu_custom_call.1']
    #allocation5 [shape = 's32[2]{0}', space=sflag, size = 0x8, scoped, tag = 'scoped memory for tpu_custom_call.1']
    #allocation6 [shape = 'u8[262144]{0}', space=vmem, size = 0x40000, scoped, tag = 'input window, operand 1']
    #allocation7 [shape = 's32[2]{0}', space=sflag, size = 0x8, scoped, tag = 'scoped memory for tpu_custom_call.1']
    #allocation8 [shape = 'u8[262144]{0}', space=vmem, size = 0x40000, scoped, tag = 'input window, operand 2']
    #allocation9 [shape = 'u8[262144]{0}', space=vmem, size = 0x40000, scoped, tag = 'input window, operand 3']
    #allocation10 [shape = 's32[2]{0}', space=sflag, size = 0x8, scoped, tag = 'scoped memory for tpu_custom_call.1']
    #allocation11 [shape = 'u8[65536]{0}', space=vmem, size = 0x10000, scoped, tag = 'output window, operand 0, single buffered']
    %9 = vsyncpa [#allocation4], 0
    %10 = vsyncpa [#allocation7], 0
    %s11 = scalar_lea.sflag [#allocation7], 1
    %12 = vsyncpa %s11, 0
    %13 = vsyncpa [#allocation10], 0
    %s14 = scalar_lea.sflag [#allocation10], 1
    %15 = vsyncpa %s14, 0
    %16 = vsyncpa [#allocation5], 0
    loop: start=0, step=1, limit=4
    $region2: #{tpu_custom_call.1} parent=1 // loop_pre_header
      _
    $region3: #{tpu_custom_call.1} parent=1 // loop_header
      %s18 = sphi 0, %s22
      %p19 = scmp.ge.s32.totalorder %s18, 4
      %s25 = sphi 0, %s37
      %s26 = sphi 0, %s33
      %s27 = sphi 0, %s25
      %s28 = sphi 0, %s26
      %s29 = sphi 0, %s27
      %s30 = sphi 0, %s28
      %s40 = sphi 0, %s42
      %s43 = sphi 0, %s40
      %s44 = sphi 0, %s43
      %s60 = sphi 0, %s44
      %s66 = sphi 0, %s68
      %s69 = sphi 0, %s66
      %s70 = sphi 0, %s69
      %s86 = sphi 0, %s70
      %s92 = sphi 0, %s94
      %s95 = sphi 0, %s92
      %s96 = sphi 0, %s95
      %s112 = sphi 0, %s96
      %s118 = sphi 0, %s120
      %s121 = sphi 0, %s118
      %s122 = sphi 0, %s121
      %s138 = sphi 0, %s122
      %s144 = sphi 0, %s146
      %s147 = sphi 0, %s144
      %s148 = sphi 0, %s147
      %s164 = sphi 0, %s148
    $region4: #{tpu_custom_call.1} parent=1 // loop_header_branch
      %21 = sbr.rel (%p19) target = $region8
    $region5: #{tpu_custom_call.1} parent=1 // loop_body
      %s23 = ssub.s32 %s18, 1
      %s24 = ssub.s32 %s18, 2
      %s31 = sadd.s32 1, %s26
      %p32 = scmp.ge.s32.totalorder %s31, 2
      %s33 = scalar_select %p32, 0, %s31
      %s34 = sadd.s32 1, %s25
      %s35 = scalar_select %p32, %s34, %s25
      %p36 = scmp.ge.s32.totalorder %s35, 1
      %s37 = scalar_select %p36, 0, %s35
      %s38 = ssub.s32 %s25, %s37
      %p39 = scmp.eq.s32.totalorder %s38, 0
      %s41 = sadd.s32 %s40, 1
      %s42 = scalar_select %p39, %s40, %s41
      %p45 = pneg %p39
      %p46 = scmp.eq.s32.totalorder %s18, 1
      %p47 = por %p45, %p46
      %p48 = scmp.ne.s32.totalorder %s40, %s43
      %p49 = scmp.eq.s32.totalorder %s18, 0
      %p50 = por %p48, %p49
      %p51 = scmp.ne.s32.totalorder %s40, %s43
      %p52 = scmp.eq.s32.totalorder %s23, 1
      %p53 = por %p51, %p52
      %p54 = scmp.ne.s32.totalorder %s43, %s44
      %p55 = scmp.eq.s32.totalorder %s23, 0
      %p56 = por %p54, %p55
      %p57 = scmp.ne.s32.totalorder %s43, %s44
      %p58 = scmp.eq.s32.totalorder %s24, 1
      %p59 = por %p57, %p58
      %p61 = scmp.ne.s32.totalorder %s44, %s60
      %p62 = scmp.eq.s32.totalorder %s24, 0
      %p63 = por %p61, %p62
      %s64 = ssub.s32 %s26, %s33
      %p65 = scmp.eq.s32.totalorder %s64, 0
      %s67 = sadd.s32 %s66, 1
      %s68 = scalar_select %p65, %s66, %s67
      %p71 = pneg %p65
      %p72 = scmp.eq.s32.totalorder %s18, 1
      %p73 = por %p71, %p72
      %p74 = scmp.ne.s32.totalorder %s66, %s69
      %p75 = scmp.eq.s32.totalorder %s18, 0
      %p76 = por %p74, %p75
      %p77 = scmp.ne.s32.totalorder %s66, %s69
      %p78 = scmp.eq.s32.totalorder %s23, 1
      %p79 = por %p77, %p78
      %p80 = scmp.ne.s32.totalorder %s69, %s70
      %p81 = scmp.eq.s32.totalorder %s23, 0
      %p82 = por %p80, %p81
      %p83 = scmp.ne.s32.totalorder %s69, %s70
      %p84 = scmp.eq.s32.totalorder %s24, 1
      %p85 = por %p83, %p84
      %p87 = scmp.ne.s32.totalorder %s70, %s86
      %p88 = scmp.eq.s32.totalorder %s24, 0
      %p89 = por %p87, %p88
      %s90 = ssub.s32 %s26, %s33
      %p91 = scmp.eq.s32.totalorder %s90, 0
      %s93 = sadd.s32 %s92, 1
      %s94 = scalar_select %p91, %s92, %s93
      %p97 = pneg %p91
      %p98 = scmp.eq.s32.totalorder %s18, 1
      %p99 = por %p97, %p98
      %p100 = scmp.ne.s32.totalorder %s92, %s95
      %p101 = scmp.eq.s32.totalorder %s18, 0
      %p102 = por %p100, %p101
      %p103 = scmp.ne.s32.totalorder %s92, %s95
      %p104 = scmp.eq.s32.totalorder %s23, 1
      %p105 = por %p103, %p104
      %p106 = scmp.ne.s32.totalorder %s95, %s96
      %p107 = scmp.eq.s32.totalorder %s23, 0
      %p108 = por %p106, %p107
      %p109 = scmp.ne.s32.totalorder %s95, %s96
      %p110 = scmp.eq.s32.totalorder %s24, 1
      %p111 = por %p109, %p110
      %p113 = scmp.ne.s32.totalorder %s96, %s112
      %p114 = scmp.eq.s32.totalorder %s24, 0
      %p115 = por %p113, %p114
      %s116 = ssub.s32 %s26, %s33
      %p117 = scmp.eq.s32.totalorder %s116, 0
      %s119 = sadd.s32 %s118, 1
      %s120 = scalar_select %p117, %s118, %s119
      %p123 = pneg %p117
      %p124 = scmp.eq.s32.totalorder %s18, 1
      %p125 = por %p123, %p124
      %p126 = scmp.ne.s32.totalorder %s118, %s121
      %p127 = scmp.eq.s32.totalorder %s18, 0
      %p128 = por %p126, %p127
      %p129 = scmp.ne.s32.totalorder %s118, %s121
      %p130 = scmp.eq.s32.totalorder %s23, 1
      %p131 = por %p129, %p130
      %p132 = scmp.ne.s32.totalorder %s121, %s122
      %p133 = scmp.eq.s32.totalorder %s23, 0
      %p134 = por %p132, %p133
      %p135 = scmp.ne.s32.totalorder %s121, %s122
      %p136 = scmp.eq.s32.totalorder %s24, 1
      %p137 = por %p135, %p136
      %p139 = scmp.ne.s32.totalorder %s122, %s138
      %p140 = scmp.eq.s32.totalorder %s24, 0
      %p141 = por %p139, %p140
      %s142 = ssub.s32 %s25, %s37
      %p143 = scmp.eq.s32.totalorder %s142, 0
      %s145 = sadd.s32 %s144, 1
      %s146 = scalar_select %p143, %s144, %s145
      %p149 = pneg %p143
      %p150 = scmp.eq.s32.totalorder %s18, 1
      %p151 = por %p149, %p150
      %p152 = scmp.ne.s32.totalorder %s144, %s147
      %p153 = scmp.eq.s32.totalorder %s18, 0
      %p154 = por %p152, %p153
      %p155 = scmp.ne.s32.totalorder %s144, %s147
      %p156 = scmp.eq.s32.totalorder %s23, 1
      %p157 = por %p155, %p156
      %p158 = scmp.ne.s32.totalorder %s147, %s148
      %p159 = scmp.eq.s32.totalorder %s23, 0
      %p160 = por %p158, %p159
      %p161 = scmp.ne.s32.totalorder %s147, %s148
      %p162 = scmp.eq.s32.totalorder %s24, 1
      %p163 = por %p161, %p162
      %p165 = scmp.ne.s32.totalorder %s148, %s164
      %p166 = scmp.eq.s32.totalorder %s24, 0
      %p167 = por %p165, %p166
      %p168 = scmp.le.s32.totalorder 1, %s18
      %p169 = scmp.lt.s32.totalorder %s18, 3
      %p170 = pnand %p168, %p169
      %p171 = pneg %p170
      // Predicated region
      $region9: #{tpu_custom_call.1} parent=5 // pred_check
        _
      $region10: #{tpu_custom_call.1} parent=5 // pred_check_branch
        %173 = sbr.rel (%p170) target = $region12
      $region11: #{tpu_custom_call.1} parent=5 // pred_region
        %s174 = ssub.s32 %s18, 1
        // Predicated region
        $region13: #{tpu_custom_call.1} parent=11 // pred_check
          %p175 = pneg %p56
        $region14: #{tpu_custom_call.1} parent=11 // pred_check_branch
          %177 = sbr.rel (%p175) target = $region16
        $region15: #{tpu_custom_call.1} parent=11 // pred_region
          %s178 = smul.u32 16, %s27
          %s180 = ssub.s32 2048, 2048
          %181 = vsyncadd [#allocation4], %s180
          %s182 = smul.addr %s178, 2
          %s183 = smul.addr %s182, 64
          %s184 = scalar_lea.hbm %s0, %s183
          %s185 = sshll.u32 [#allocation3], 4
          %s186 = int_to_ptr.vmem [resolvable:$true] %s185
          %191 = dma.hbm_to_vmem [thread:$0]  %s184, 2048, %s186, [#allocation4], 128, 128, 8
        $region16: #{tpu_custom_call.1} parent=11 // pred_fallthru
          _
      $region12: #{tpu_custom_call.1} parent=5 // pred_fallthru
        _
      %p192 = scmp.lt.s32.totalorder %s18, 2
      // Predicated region
      $region17: #{tpu_custom_call.1} parent=5 // pred_check
        %p193 = pneg %p192
      $region18: #{tpu_custom_call.1} parent=5 // pred_check_branch
        %195 = sbr.rel (%p193) target = $region20
      $region19: #{tpu_custom_call.1} parent=5 // pred_region
        // Predicated region
        $region21: #{tpu_custom_call.1} parent=19 // pred_check
          %p196 = pneg %p76
        $region22: #{tpu_custom_call.1} parent=19 // pred_check_branch
          %198 = sbr.rel (%p196) target = $region24
        $region23: #{tpu_custom_call.1} parent=19 // pred_region
          %s199 = sand.u32 %s18, 1
          %s200 = scalar_lea.sflag [#allocation7], %s199
          %s201 = sand.u32 %s66, 1
          %s202 = smul.addr %s201, 256
          %s203 = scalar_lea.vmem [#allocation6], %s202
          %s204 = smul.u32 2, %s26
          %s206 = ssub.s32 4096, 4096
          %207 = vsyncadd %s200, %s206
          %s208 = smul.addr %s204, 64
          %s209 = scalar_lea.hbm %s1, %s208
          %s210 = sshll.u32 %s203, 4
          %s211 = int_to_ptr.vmem [resolvable:$true] %s210
          %216 = dma.hbm_to_vmem [thread:$0]  %s209, 4096, %s211, %s200, 256, 128, 8
        $region24: #{tpu_custom_call.1} parent=19 // pred_fallthru
          _
        // Predicated region
        $region25: #{tpu_custom_call.1} parent=19 // pred_check
          %p217 = pneg %p102
        $region26: #{tpu_custom_call.1} parent=19 // pred_check_branch
          %219 = sbr.rel (%p217) target = $region28
        $region27: #{tpu_custom_call.1} parent=19 // pred_region
          %s220 = sand.u32 %s18, 1
          %s221 = scalar_lea.sflag [#allocation7], %s220
          %s222 = sand.u32 %s92, 1
          %s223 = smul.addr %s222, 256
          %s224 = scalar_lea.vmem [#allocation8], %s223
          %s225 = smul.u32 2, %s26
          %s227 = ssub.s32 4096, 4096
          %228 = vsyncadd %s221, %s227
          %s229 = smul.addr %s225, 64
          %s230 = scalar_lea.hbm %s2, %s229
          %s231 = sshll.u32 %s224, 4
          %s232 = int_to_ptr.vmem [resolvable:$true] %s231
          %237 = dma.hbm_to_vmem [thread:$0]  %s230, 4096, %s232, %s221, 256, 128, 8
        $region28: #{tpu_custom_call.1} parent=19 // pred_fallthru
          _
        // Predicated region
        $region29: #{tpu_custom_call.1} parent=19 // pred_check
          %p238 = pneg %p128
        $region30: #{tpu_custom_call.1} parent=19 // pred_check_branch
          %240 = sbr.rel (%p238) target = $region32
        $region31: #{tpu_custom_call.1} parent=19 // pred_region
          %s241 = sand.u32 %s118, 1
          %s242 = scalar_lea.sflag [#allocation10], %s241
          %s243 = sand.u32 %s118, 1
          %s244 = smul.addr %s243, 256
          %s245 = scalar_lea.vmem [#allocation9], %s244
          %s246 = smul.u32 32, %s26
          %s248 = ssub.s32 4096, 4096
          %249 = vsyncadd %s242, %s248
          %s250 = smul.addr %s246, 2
          %s251 = smul.addr %s250, 64
          %s252 = scalar_lea.hbm %s3, %s251
          %s253 = sshll.u32 %s245, 4
          %s254 = int_to_ptr.vmem [resolvable:$true] %s253
          %259 = dma.hbm_to_vmem [thread:$0]  %s252, 4096, %s254, %s242, 128, 128, 8
        $region32: #{tpu_custom_call.1} parent=19 // pred_fallthru
          _
      $region20: #{tpu_custom_call.1} parent=5 // pred_fallthru
        _
      %p260 = scmp.le.s32.totalorder 1, %s18
      %p261 = scmp.lt.s32.totalorder %s18, 3
      %p262 = pnand %p260, %p261
      %p263 = pneg %p262
      // Predicated region
      $region33: #{tpu_custom_call.1} parent=5 // pred_check
        _
      $region34: #{tpu_custom_call.1} parent=5 // pred_check_branch
        %265 = sbr.rel (%p262) target = $region36
      $region35: #{tpu_custom_call.1} parent=5 // pred_region
        %s266 = ssub.s32 %s18, 1
        // Predicated region
        $region37: #{tpu_custom_call.1} parent=35 // pred_check
          %p267 = pneg %p56
        $region38: #{tpu_custom_call.1} parent=35 // pred_check_branch
          %269 = sbr.rel (%p267) target = $region40
        $region39: #{tpu_custom_call.1} parent=35 // pred_region
          %270 = dma.done [#allocation4], 2048
        $region40: #{tpu_custom_call.1} parent=35 // pred_fallthru
          _
        %s271 = sand.u32 %s23, 1
        %s272 = scalar_lea.sflag [#allocation7], %s271
        %s273 = sand.u32 %s69, 1
        %s274 = smul.addr %s273, 256
        %s275 = scalar_lea.vmem [#allocation6], %s274
        // Predicated region
        $region41: #{tpu_custom_call.1} parent=35 // pred_check
          %p276 = pneg %p82
        $region42: #{tpu_custom_call.1} parent=35 // pred_check_branch
          %278 = sbr.rel (%p276) target = $region44
        $region43: #{tpu_custom_call.1} parent=35 // pred_region
          %279 = dma.done %s272, 4096
        $region44: #{tpu_custom_call.1} parent=35 // pred_fallthru
          _
        %s280 = sand.u32 %s23, 1
        %s281 = scalar_lea.sflag [#allocation7], %s280
        %s282 = sand.u32 %s95, 1
        %s283 = smul.addr %s282, 256
        %s284 = scalar_lea.vmem [#allocation8], %s283
        // Predicated region
        $region45: #{tpu_custom_call.1} parent=35 // pred_check
          %p285 = pneg %p108
        $region46: #{tpu_custom_call.1} parent=35 // pred_check_branch
          %287 = sbr.rel (%p285) target = $region48
        $region47: #{tpu_custom_call.1} parent=35 // pred_region
          %288 = dma.done %s281, 4096
        $region48: #{tpu_custom_call.1} parent=35 // pred_fallthru
          _
        %s289 = sand.u32 %s121, 1
        %s290 = scalar_lea.sflag [#allocation10], %s289
        %s291 = sand.u32 %s121, 1
        %s292 = smul.addr %s291, 256
        %s293 = scalar_lea.vmem [#allocation9], %s292
        // Predicated region
        $region49: #{tpu_custom_call.1} parent=35 // pred_check
          %p294 = pneg %p134
        $region50: #{tpu_custom_call.1} parent=35 // pred_check_branch
          %296 = sbr.rel (%p294) target = $region52
        $region51: #{tpu_custom_call.1} parent=35 // pred_region
          %297 = dma.done %s290, 4096
        $region52: #{tpu_custom_call.1} parent=35 // pred_fallthru
          _
        %p298 = pneg %p56
        %p299 = pneg %p53
        %s300 = sand.u32 %s23, 1
        %s301 = scalar_lea.sflag [#allocation7], %s300
        %s302 = sand.u32 %s69, 1
        %s303 = smul.addr %s302, 256
        %s304 = scalar_lea.vmem [#allocation6], %s303
        %p305 = pneg %p82
        %p306 = pneg %p79
        %s307 = sand.u32 %s23, 1
        %s308 = scalar_lea.sflag [#allocation7], %s307
        %s309 = sand.u32 %s95, 1
        %s310 = smul.addr %s309, 256
        %s311 = scalar_lea.vmem [#allocation8], %s310
        %p312 = pneg %p108
        %p313 = pneg %p105
        %s314 = sand.u32 %s121, 1
        %s315 = scalar_lea.sflag [#allocation10], %s314
        %s316 = sand.u32 %s121, 1
        %s317 = smul.addr %s316, 256
        %s318 = scalar_lea.vmem [#allocation9], %s317
        %p319 = pneg %p134
        %p320 = pneg %p131
        %p321 = pneg %p160
        %p322 = pneg %p157
        %s323 = smul.u32 16, %s27
        %s324 = smul.u32 2, %s28
        %s325 = smul.u32 2, %s28
        %s326 = smul.u32 32, %s28
        %s327 = smul.u32 16, %s27
        %p328 = scmp.eq.s32.totalorder %s28, 0
        // Predicated region
        $region53: #{tpu_custom_call.1} parent=35 // pred_check
          %p329 = pneg %p328
        $region54: #{tpu_custom_call.1} parent=35 // pred_check_branch
          %331 = sbr.rel (%p329) target = $region56
        $region55: #{tpu_custom_call.1} parent=35 // pred_region
          %332 = vst [vmem:[#allocation2] sm:$0xff] 0.0
          %333 = vst [vmem:[#allocation2 + $0x8] sm:$0xff] 0.0
          %334 = vst [vmem:[#allocation2 + $0x10] sm:$0xff] 0.0
          %335 = vst [vmem:[#allocation2 + $0x18] sm:$0xff] 0.0
          %336 = vst [vmem:[#allocation2 + $0x20] sm:$0xff] 0.0
          %337 = vst [vmem:[#allocation2 + $0x28] sm:$0xff] 0.0
          %338 = vst [vmem:[#allocation2 + $0x30] sm:$0xff] 0.0
          %339 = vst [vmem:[#allocation2 + $0x38] sm:$0xff] 0.0
          %340 = vst [vmem:[#allocation2 + $0x40] sm:$0xff] 0.0
          %341 = vst [vmem:[#allocation2 + $0x48] sm:$0xff] 0.0
          %342 = vst [vmem:[#allocation2 + $0x50] sm:$0xff] 0.0
          %343 = vst [vmem:[#allocation2 + $0x58] sm:$0xff] 0.0
          %344 = vst [vmem:[#allocation2 + $0x60] sm:$0xff] 0.0
          %345 = vst [vmem:[#allocation2 + $0x68] sm:$0xff] 0.0
          %346 = vst [vmem:[#allocation2 + $0x70] sm:$0xff] 0.0
          %347 = vst [vmem:[#allocation2 + $0x78] sm:$0xff] 0.0
          %348 = vst [vmem:[#allocation2 + $0x80] sm:$0xff] 0.0
          %349 = vst [vmem:[#allocation2 + $0x88] sm:$0xff] 0.0
          %350 = vst [vmem:[#allocation2 + $0x90] sm:$0xff] 0.0
          %351 = vst [vmem:[#allocation2 + $0x98] sm:$0xff] 0.0
          %352 = vst [vmem:[#allocation2 + $0xa0] sm:$0xff] 0.0
          %353 = vst [vmem:[#allocation2 + $0xa8] sm:$0xff] 0.0
          %354 = vst [vmem:[#allocation2 + $0xb0] sm:$0xff] 0.0
          %355 = vst [vmem:[#allocation2 + $0xb8] sm:$0xff] 0.0
          %356 = vst [vmem:[#allocation2 + $0xc0] sm:$0xff] 0.0
          %357 = vst [vmem:[#allocation2 + $0xc8] sm:$0xff] 0.0
          %358 = vst [vmem:[#allocation2 + $0xd0] sm:$0xff] 0.0
          %359 = vst [vmem:[#allocation2 + $0xd8] sm:$0xff] 0.0
          %360 = vst [vmem:[#allocation2 + $0xe0] sm:$0xff] 0.0
          %361 = vst [vmem:[#allocation2 + $0xe8] sm:$0xff] 0.0
          %362 = vst [vmem:[#allocation2 + $0xf0] sm:$0xff] 0.0
          %363 = vst [vmem:[#allocation2 + $0xf8] sm:$0xff] 0.0
        $region56: #{tpu_custom_call.1} parent=35 // pred_fallthru
          _
        %v364 = vld [vmem:[#allocation3] sm:$0xff]
        %v365 = vld [vmem:[#allocation3 + $0x8] sm:$0xff]
        %v366 = vld [vmem:[#allocation3 + $0x10] sm:$0xff]
        %v367 = vld [vmem:[#allocation3 + $0x18] sm:$0xff]
        %v368 = vld [vmem:[#allocation3 + $0x20] sm:$0xff]
        %v369 = vld [vmem:[#allocation3 + $0x28] sm:$0xff]
        %v370 = vld [vmem:[#allocation3 + $0x30] sm:$0xff]
        %v371 = vld [vmem:[#allocation3 + $0x38] sm:$0xff]
        %v372 = vld [vmem:[#allocation3 + $0x40] sm:$0xff]
        %v373 = vld [vmem:[#allocation3 + $0x48] sm:$0xff]
        %v374 = vld [vmem:[#allocation3 + $0x50] sm:$0xff]
        %v375 = vld [vmem:[#allocation3 + $0x58] sm:$0xff]
        %v376 = vld [vmem:[#allocation3 + $0x60] sm:$0xff]
        %v377 = vld [vmem:[#allocation3 + $0x68] sm:$0xff]
        %v378 = vld [vmem:[#allocation3 + $0x70] sm:$0xff]
        %v379 = vld [vmem:[#allocation3 + $0x78] sm:$0xff]
        %v380 = vld [vmem:[%s275] sm:$0xff]
        %v381 = vld [vmem:[%s275 + $0x8] sm:$0xff]
        %v382 = vld [vmem:[%s275 + $0x10] sm:$0xff]
        %v383 = vld [vmem:[%s275 + $0x18] sm:$0xff]
        %v384 = vld [vmem:[%s275 + $0x20] sm:$0xff]
        %v385 = vld [vmem:[%s275 + $0x28] sm:$0xff]
        %v386 = vld [vmem:[%s275 + $0x30] sm:$0xff]
        %v387 = vld [vmem:[%s275 + $0x38] sm:$0xff]
        %v388 = vld [vmem:[%s275 + $0x40] sm:$0xff]
        %v389 = vld [vmem:[%s275 + $0x48] sm:$0xff]
        %v390 = vld [vmem:[%s275 + $0x50] sm:$0xff]
        %v391 = vld [vmem:[%s275 + $0x58] sm:$0xff]
        %v392 = vld [vmem:[%s275 + $0x60] sm:$0xff]
        %v393 = vld [vmem:[%s275 + $0x68] sm:$0xff]
        %v394 = vld [vmem:[%s275 + $0x70] sm:$0xff]
        %v395 = vld [vmem:[%s275 + $0x78] sm:$0xff]
        %v396 = vld [vmem:[%s275 + $0x80] sm:$0xff]
        %v397 = vld [vmem:[%s275 + $0x88] sm:$0xff]
        %v398 = vld [vmem:[%s275 + $0x90] sm:$0xff]
        %v399 = vld [vmem:[%s275 + $0x98] sm:$0xff]
        %v400 = vld [vmem:[%s275 + $0xa0] sm:$0xff]
        %v401 = vld [vmem:[%s275 + $0xa8] sm:$0xff]
        %v402 = vld [vmem:[%s275 + $0xb0] sm:$0xff]
        %v403 = vld [vmem:[%s275 + $0xb8] sm:$0xff]
        %v404 = vld [vmem:[%s275 + $0xc0] sm:$0xff]
        %v405 = vld [vmem:[%s275 + $0xc8] sm:$0xff]
        %v406 = vld [vmem:[%s275 + $0xd0] sm:$0xff]
        %v407 = vld [vmem:[%s275 + $0xd8] sm:$0xff]
        %v408 = vld [vmem:[%s275 + $0xe0] sm:$0xff]
        %v409 = vld [vmem:[%s275 + $0xe8] sm:$0xff]
        %v410 = vld [vmem:[%s275 + $0xf0] sm:$0xff]
        %v411 = vld [vmem:[%s275 + $0xf8] sm:$0xff]
        %v428 = vunpack.c.l.b16 %v364
        %v429 = vunpack.c.h.b16 %v364
        %v430 = vunpack.c.l.b16 %v365
        %v431 = vunpack.c.h.b16 %v365
        %v432 = vunpack.c.l.b16 %v366
        %v433 = vunpack.c.h.b16 %v366
        %v434 = vunpack.c.l.b16 %v367
        %v435 = vunpack.c.h.b16 %v367
        %v436 = vunpack.c.l.b16 %v368
        %v437 = vunpack.c.h.b16 %v368
        %v438 = vunpack.c.l.b16 %v369
        %v439 = vunpack.c.h.b16 %v369
        %v440 = vunpack.c.l.b16 %v370
        %v441 = vunpack.c.h.b16 %v370
        %v442 = vunpack.c.l.b16 %v371
        %v443 = vunpack.c.h.b16 %v371
        %v444 = vunpack.c.l.b16 %v372
        %v445 = vunpack.c.h.b16 %v372
        %v446 = vunpack.c.l.b16 %v373
        %v447 = vunpack.c.h.b16 %v373
        %v448 = vunpack.c.l.b16 %v374
        %v449 = vunpack.c.h.b16 %v374
        %v450 = vunpack.c.l.b16 %v375
        %v451 = vunpack.c.h.b16 %v375
        %v452 = vunpack.c.l.b16 %v376
        %v453 = vunpack.c.h.b16 %v376
        %v454 = vunpack.c.l.b16 %v377
        %v455 = vunpack.c.h.b16 %v377
        %v456 = vunpack.c.l.b16 %v378
        %v457 = vunpack.c.h.b16 %v378
        %v458 = vunpack.c.l.b16 %v379
        %v459 = vunpack.c.h.b16 %v379
        %v460 = vpack.c.b16 %v430, %v428
        %v461 = vpack.c.b16 %v431, %v429
        %v462 = vpack.c.b16 %v434, %v432
        %v463 = vpack.c.b16 %v435, %v433
        %v464 = vpack.c.b16 %v438, %v436
        %v465 = vpack.c.b16 %v439, %v437
        %v466 = vpack.c.b16 %v442, %v440
        %v467 = vpack.c.b16 %v443, %v441
        %v468 = vpack.c.b16 %v446, %v444
        %v469 = vpack.c.b16 %v447, %v445
        %v470 = vpack.c.b16 %v450, %v448
        %v471 = vpack.c.b16 %v451, %v449
        %v472 = vpack.c.b16 %v454, %v452
        %v473 = vpack.c.b16 %v455, %v453
        %v474 = vpack.c.b16 %v458, %v456
        %v475 = vpack.c.b16 %v459, %v457
        %v524 = vunpack.c.l.b16 %v380
        %v525 = vunpack.c.h.b16 %v380
        %v526 = vunpack.c.l.b16 %v381
        %v527 = vunpack.c.h.b16 %v381
        %v528 = vunpack.c.l.b16 %v382
        %v529 = vunpack.c.h.b16 %v382
        %v530 = vunpack.c.l.b16 %v383
        %v531 = vunpack.c.h.b16 %v383
        %v532 = vunpack.c.l.b16 %v384
        %v533 = vunpack.c.h.b16 %v384
        %v534 = vunpack.c.l.b16 %v385
        %v535 = vunpack.c.h.b16 %v385
        %v536 = vunpack.c.l.b16 %v386
        %v537 = vunpack.c.h.b16 %v386
        %v538 = vunpack.c.l.b16 %v387
        %v539 = vunpack.c.h.b16 %v387
        %v540 = vunpack.c.l.b16 %v388
        %v541 = vunpack.c.h.b16 %v388
        %v542 = vunpack.c.l.b16 %v389
        %v543 = vunpack.c.h.b16 %v389
        %v544 = vunpack.c.l.b16 %v390
        %v545 = vunpack.c.h.b16 %v390
        %v546 = vunpack.c.l.b16 %v391
        %v547 = vunpack.c.h.b16 %v391
        %v548 = vunpack.c.l.b16 %v392
        %v549 = vunpack.c.h.b16 %v392
        %v550 = vunpack.c.l.b16 %v393
        %v551 = vunpack.c.h.b16 %v393
        %v552 = vunpack.c.l.b16 %v394
        %v553 = vunpack.c.h.b16 %v394
        %v554 = vunpack.c.l.b16 %v395
        %v555 = vunpack.c.h.b16 %v395
        %v556 = vunpack.c.l.b16 %v396
        %v557 = vunpack.c.h.b16 %v396
        %v558 = vunpack.c.l.b16 %v397
        %v559 = vunpack.c.h.b16 %v397
        %v560 = vunpack.c.l.b16 %v398
        %v561 = vunpack.c.h.b16 %v398
        %v562 = vunpack.c.l.b16 %v399
        %v563 = vunpack.c.h.b16 %v399
        %v564 = vunpack.c.l.b16 %v400
        %v565 = vunpack.c.h.b16 %v400
        %v566 = vunpack.c.l.b16 %v401
        %v567 = vunpack.c.h.b16 %v401
        %v568 = vunpack.c.l.b16 %v402
        %v569 = vunpack.c.h.b16 %v402
        %v570 = vunpack.c.l.b16 %v403
        %v571 = vunpack.c.h.b16 %v403
        %v572 = vunpack.c.l.b16 %v404
        %v573 = vunpack.c.h.b16 %v404
        %v574 = vunpack.c.l.b16 %v405
        %v575 = vunpack.c.h.b16 %v405
        %v576 = vunpack.c.l.b16 %v406
        %v577 = vunpack.c.h.b16 %v406
        %v578 = vunpack.c.l.b16 %v407
        %v579 = vunpack.c.h.b16 %v407
        %v580 = vunpack.c.l.b16 %v408
        %v581 = vunpack.c.h.b16 %v408
        %v582 = vunpack.c.l.b16 %v409
        %v583 = vunpack.c.h.b16 %v409
        %v584 = vunpack.c.l.b16 %v410
        %v585 = vunpack.c.h.b16 %v410
        %v586 = vunpack.c.l.b16 %v411
        %v587 = vunpack.c.h.b16 %v411
        %v588 = vpack.c.b16 %v526, %v524
        %v589 = vpack.c.b16 %v527, %v525
        %v590 = vpack.c.b16 %v530, %v528
        %v591 = vpack.c.b16 %v531, %v529
        %v592 = vpack.c.b16 %v534, %v532
        %v593 = vpack.c.b16 %v535, %v533
        %v594 = vpack.c.b16 %v538, %v536
        %v595 = vpack.c.b16 %v539, %v537
        %v596 = vpack.c.b16 %v542, %v540
        %v597 = vpack.c.b16 %v543, %v541
        %v598 = vpack.c.b16 %v546, %v544
        %v599 = vpack.c.b16 %v547, %v545
        %v600 = vpack.c.b16 %v550, %v548
        %v601 = vpack.c.b16 %v551, %v549
        %v602 = vpack.c.b16 %v554, %v552
        %v603 = vpack.c.b16 %v555, %v553
        %v604 = vpack.c.b16 %v558, %v556
        %v605 = vpack.c.b16 %v559, %v557
        %v606 = vpack.c.b16 %v562, %v560
        %v607 = vpack.c.b16 %v563, %v561
        %v608 = vpack.c.b16 %v566, %v564
        %v609 = vpack.c.b16 %v567, %v565
        %v610 = vpack.c.b16 %v570, %v568
        %v611 = vpack.c.b16 %v571, %v569
        %v612 = vpack.c.b16 %v574, %v572
        %v613 = vpack.c.b16 %v575, %v573
        %v614 = vpack.c.b16 %v578, %v576
        %v615 = vpack.c.b16 %v579, %v577
        %v616 = vpack.c.b16 %v582, %v580
        %v617 = vpack.c.b16 %v583, %v581
        %v618 = vpack.c.b16 %v586, %v584
        %v619 = vpack.c.b16 %v587, %v585
        %652 = vmatprep.subr.bf16.mxu0 %v589
        %653 = vmatpush1.bf16.msra.mxu0 %v588
        %654 = vmatprep.subr.bf16.mxu0 %v591
        %655 = vmatpush1.bf16.msra.mxu0 %v590
        %656 = vmatprep.subr.bf16.mxu0 %v593
        %657 = vmatpush1.bf16.msra.mxu0 %v592
        %658 = vmatprep.subr.bf16.mxu0 %v595
        %659 = vmatpush1.bf16.msra.mxu0 %v594
        %660 = vmatprep.subr.bf16.mxu0 %v597
        %661 = vmatpush1.bf16.msra.mxu0 %v596
        %662 = vmatprep.subr.bf16.mxu0 %v599
        %663 = vmatpush1.bf16.msra.mxu0 %v598
        %664 = vmatprep.subr.bf16.mxu0 %v601
        %665 = vmatpush1.bf16.msra.mxu0 %v600
        %666 = vmatprep.subr.bf16.mxu0 %v603
        %667 = vmatpush1.bf16.msra.mxu0 %v602
        %668 = vmatprep.subr.bf16.mxu0 %v605
        %669 = vmatpush1.bf16.msra.mxu0 %v604
        %670 = vmatprep.subr.bf16.mxu0 %v607
        %671 = vmatpush1.bf16.msra.mxu0 %v606
        %672 = vmatprep.subr.bf16.mxu0 %v609
        %673 = vmatpush1.bf16.msra.mxu0 %v608
        %674 = vmatprep.subr.bf16.mxu0 %v611
        %675 = vmatpush1.bf16.msra.mxu0 %v610
        %676 = vmatprep.subr.bf16.mxu0 %v613
        %677 = vmatpush1.bf16.msra.mxu0 %v612
        %678 = vmatprep.subr.bf16.mxu0 %v615
        %679 = vmatpush1.bf16.msra.mxu0 %v614
        %680 = vmatprep.subr.bf16.mxu0 %v617
        %681 = vmatpush1.bf16.msra.mxu0 %v616
        %682 = vmatprep.subr.bf16.mxu0 %v619
        %683 = vmatpush1.bf16.msra.mxu0 %v618
        %684 = vmatprep.mubr.bf16.mxu0 %v461
        %685 = vmatmul.mubr.bf16.gmra.mrb[0].mxu0 %v460
        %v686 = vpop.f32.mrb[0].mxu0
        %v687 = vadd.f32 0.0, %v686
        %v688 = vpop.f32.mrb[0].mxu0
        %v689 = vadd.f32 0.0, %v688
        %v690 = vpop.f32.mrb[0].mxu0
        %v691 = vadd.f32 0.0, %v690
        %v692 = vpop.f32.mrb[0].mxu0
        %v693 = vadd.f32 0.0, %v692
        %694 = vmatprep.mubr.bf16.mxu0 %v463
        %695 = vmatmul.mubr.bf16.gmra.mrb[0].mxu0 %v462
        %v696 = vpop.f32.mrb[0].mxu0
        %v697 = vadd.f32 0.0, %v696
        %v698 = vpop.f32.mrb[0].mxu0
        %v699 = vadd.f32 0.0, %v698
        %v700 = vpop.f32.mrb[0].mxu0
        %v701 = vadd.f32 0.0, %v700
        %v702 = vpop.f32.mrb[0].mxu0
        %v703 = vadd.f32 0.0, %v702
        %704 = vmatprep.mubr.bf16.mxu0 %v465
        %705 = vmatmul.mubr.bf16.gmra.mrb[0].mxu0 %v464
        %v706 = vpop.f32.mrb[0].mxu0
        %v707 = vadd.f32 0.0, %v706
        %v708 = vpop.f32.mrb[0].mxu0
        %v709 = vadd.f32 0.0, %v708
        %v710 = vpop.f32.mrb[0].mxu0
        %v711 = vadd.f32 0.0, %v710
        %v712 = vpop.f32.mrb[0].mxu0
        %v713 = vadd.f32 0.0, %v712
        %714 = vmatprep.mubr.bf16.mxu0 %v467
        %715 = vmatmul.mubr.bf16.gmra.mrb[0].mxu0 %v466
        %v716 = vpop.f32.mrb[0].mxu0
        %v717 = vadd.f32 0.0, %v716
        %v718 = vpop.f32.mrb[0].mxu0
        %v719 = vadd.f32 0.0, %v718
        %v720 = vpop.f32.mrb[0].mxu0
        %v721 = vadd.f32 0.0, %v720
        %v722 = vpop.f32.mrb[0].mxu0
        %v723 = vadd.f32 0.0, %v722
        %724 = vmatprep.mubr.bf16.mxu0 %v469
        %725 = vmatmul.mubr.bf16.gmra.mrb[0].mxu0 %v468
        %v726 = vpop.f32.mrb[0].mxu0
        %v727 = vadd.f32 0.0, %v726
        %v728 = vpop.f32.mrb[0].mxu0
        %v729 = vadd.f32 0.0, %v728
        %v730 = vpop.f32.mrb[0].mxu0
        %v731 = vadd.f32 0.0, %v730
        %v732 = vpop.f32.mrb[0].mxu0
        %v733 = vadd.f32 0.0, %v732
        %734 = vmatprep.mubr.bf16.mxu0 %v471
        %735 = vmatmul.mubr.bf16.gmra.mrb[0].mxu0 %v470
        %v736 = vpop.f32.mrb[0].mxu0
        %v737 = vadd.f32 0.0, %v736
        %v738 = vpop.f32.mrb[0].mxu0
        %v739 = vadd.f32 0.0, %v738
        %v740 = vpop.f32.mrb[0].mxu0
        %v741 = vadd.f32 0.0, %v740
        %v742 = vpop.f32.mrb[0].mxu0
        %v743 = vadd.f32 0.0, %v742
        %744 = vmatprep.mubr.bf16.mxu0 %v473
        %745 = vmatmul.mubr.bf16.gmra.mrb[0].mxu0 %v472
        %v746 = vpop.f32.mrb[0].mxu0
        %v747 = vadd.f32 0.0, %v746
        %v748 = vpop.f32.mrb[0].mxu0
        %v749 = vadd.f32 0.0, %v748
        %v750 = vpop.f32.mrb[0].mxu0
        %v751 = vadd.f32 0.0, %v750
        %v752 = vpop.f32.mrb[0].mxu0
        %v753 = vadd.f32 0.0, %v752
        %754 = vmatprep.mubr.bf16.mxu0 %v475
        %755 = vmatmul.mubr.bf16.gmra.mrb[0].mxu0 %v474
        %v756 = vpop.f32.mrb[0].mxu0
        %v757 = vadd.f32 0.0, %v756
        %v758 = vpop.f32.mrb[0].mxu0
        %v759 = vadd.f32 0.0, %v758
        %v760 = vpop.f32.mrb[0].mxu0
        %v761 = vadd.f32 0.0, %v760
        %v762 = vpop.f32.mrb[0].mxu0
        %v763 = vadd.f32 0.0, %v762
        %764 = vdwg.mxu0
        %v765 = vld [vmem:[%s284] sm:$0xff]
        %v766 = vld [vmem:[%s284 + $0x8] sm:$0xff]
        %v767 = vld [vmem:[%s284 + $0x10] sm:$0xff]
        %v768 = vld [vmem:[%s284 + $0x18] sm:$0xff]
        %v769 = vld [vmem:[%s284 + $0x20] sm:$0xff]
        %v770 = vld [vmem:[%s284 + $0x28] sm:$0xff]
        %v771 = vld [vmem:[%s284 + $0x30] sm:$0xff]
        %v772 = vld [vmem:[%s284 + $0x38] sm:$0xff]
        %v773 = vld [vmem:[%s284 + $0x40] sm:$0xff]
        %v774 = vld [vmem:[%s284 + $0x48] sm:$0xff]
        %v775 = vld [vmem:[%s284 + $0x50] sm:$0xff]
        %v776 = vld [vmem:[%s284 + $0x58] sm:$0xff]
        %v777 = vld [vmem:[%s284 + $0x60] sm:$0xff]
        %v778 = vld [vmem:[%s284 + $0x68] sm:$0xff]
        %v779 = vld [vmem:[%s284 + $0x70] sm:$0xff]
        %v780 = vld [vmem:[%s284 + $0x78] sm:$0xff]
        %v781 = vld [vmem:[%s284 + $0x80] sm:$0xff]
        %v782 = vld [vmem:[%s284 + $0x88] sm:$0xff]
        %v783 = vld [vmem:[%s284 + $0x90] sm:$0xff]
        %v784 = vld [vmem:[%s284 + $0x98] sm:$0xff]
        %v785 = vld [vmem:[%s284 + $0xa0] sm:$0xff]
        %v786 = vld [vmem:[%s284 + $0xa8] sm:$0xff]
        %v787 = vld [vmem:[%s284 + $0xb0] sm:$0xff]
        %v788 = vld [vmem:[%s284 + $0xb8] sm:$0xff]
        %v789 = vld [vmem:[%s284 + $0xc0] sm:$0xff]
        %v790 = vld [vmem:[%s284 + $0xc8] sm:$0xff]
        %v791 = vld [vmem:[%s284 + $0xd0] sm:$0xff]
        %v792 = vld [vmem:[%s284 + $0xd8] sm:$0xff]
        %v793 = vld [vmem:[%s284 + $0xe0] sm:$0xff]
        %v794 = vld [vmem:[%s284 + $0xe8] sm:$0xff]
        %v795 = vld [vmem:[%s284 + $0xf0] sm:$0xff]
        %v796 = vld [vmem:[%s284 + $0xf8] sm:$0xff]
        %v829 = vunpack.c.l.b16 %v765
        %v830 = vunpack.c.h.b16 %v765
        %v831 = vunpack.c.l.b16 %v766
        %v832 = vunpack.c.h.b16 %v766
        %v833 = vunpack.c.l.b16 %v767
        %v834 = vunpack.c.h.b16 %v767
        %v835 = vunpack.c.l.b16 %v768
        %v836 = vunpack.c.h.b16 %v768
        %v837 = vunpack.c.l.b16 %v769
        %v838 = vunpack.c.h.b16 %v769
        %v839 = vunpack.c.l.b16 %v770
        %v840 = vunpack.c.h.b16 %v770
        %v841 = vunpack.c.l.b16 %v771
        %v842 = vunpack.c.h.b16 %v771
        %v843 = vunpack.c.l.b16 %v772
        %v844 = vunpack.c.h.b16 %v772
        %v845 = vunpack.c.l.b16 %v773
        %v846 = vunpack.c.h.b16 %v773
        %v847 = vunpack.c.l.b16 %v774
        %v848 = vunpack.c.h.b16 %v774
        %v849 = vunpack.c.l.b16 %v775
        %v850 = vunpack.c.h.b16 %v775
        %v851 = vunpack.c.l.b16 %v776
        %v852 = vunpack.c.h.b16 %v776
        %v853 = vunpack.c.l.b16 %v777
        %v854 = vunpack.c.h.b16 %v777
        %v855 = vunpack.c.l.b16 %v778
        %v856 = vunpack.c.h.b16 %v778
        %v857 = vunpack.c.l.b16 %v779
        %v858 = vunpack.c.h.b16 %v779
        %v859 = vunpack.c.l.b16 %v780
        %v860 = vunpack.c.h.b16 %v780
        %v861 = vunpack.c.l.b16 %v781
        %v862 = vunpack.c.h.b16 %v781
        %v863 = vunpack.c.l.b16 %v782
        %v864 = vunpack.c.h.b16 %v782
        %v865 = vunpack.c.l.b16 %v783
        %v866 = vunpack.c.h.b16 %v783
        %v867 = vunpack.c.l.b16 %v784
        %v868 = vunpack.c.h.b16 %v784
        %v869 = vunpack.c.l.b16 %v785
        %v870 = vunpack.c.h.b16 %v785
        %v871 = vunpack.c.l.b16 %v786
        %v872 = vunpack.c.h.b16 %v786
        %v873 = vunpack.c.l.b16 %v787
        %v874 = vunpack.c.h.b16 %v787
        %v875 = vunpack.c.l.b16 %v788
        %v876 = vunpack.c.h.b16 %v788
        %v877 = vunpack.c.l.b16 %v789
        %v878 = vunpack.c.h.b16 %v789
        %v879 = vunpack.c.l.b16 %v790
        %v880 = vunpack.c.h.b16 %v790
        %v881 = vunpack.c.l.b16 %v791
        %v882 = vunpack.c.h.b16 %v791
        %v883 = vunpack.c.l.b16 %v792
        %v884 = vunpack.c.h.b16 %v792
        %v885 = vunpack.c.l.b16 %v793
        %v886 = vunpack.c.h.b16 %v793
        %v887 = vunpack.c.l.b16 %v794
        %v888 = vunpack.c.h.b16 %v794
        %v889 = vunpack.c.l.b16 %v795
        %v890 = vunpack.c.h.b16 %v795
        %v891 = vunpack.c.l.b16 %v796
        %v892 = vunpack.c.h.b16 %v796
        %v893 = vpack.c.b16 %v831, %v829
        %v894 = vpack.c.b16 %v832, %v830
        %v895 = vpack.c.b16 %v835, %v833
        %v896 = vpack.c.b16 %v836, %v834
        %v897 = vpack.c.b16 %v839, %v837
        %v898 = vpack.c.b16 %v840, %v838
        %v899 = vpack.c.b16 %v843, %v841
        %v900 = vpack.c.b16 %v844, %v842
        %v901 = vpack.c.b16 %v847, %v845
        %v902 = vpack.c.b16 %v848, %v846
        %v903 = vpack.c.b16 %v851, %v849
        %v904 = vpack.c.b16 %v852, %v850
        %v905 = vpack.c.b16 %v855, %v853
        %v906 = vpack.c.b16 %v856, %v854
        %v907 = vpack.c.b16 %v859, %v857
        %v908 = vpack.c.b16 %v860, %v858
        %v909 = vpack.c.b16 %v863, %v861
        %v910 = vpack.c.b16 %v864, %v862
        %v911 = vpack.c.b16 %v867, %v865
        %v912 = vpack.c.b16 %v868, %v866
        %v913 = vpack.c.b16 %v871, %v869
        %v914 = vpack.c.b16 %v872, %v870
        %v915 = vpack.c.b16 %v875, %v873
        %v916 = vpack.c.b16 %v876, %v874
        %v917 = vpack.c.b16 %v879, %v877
        %v918 = vpack.c.b16 %v880, %v878
        %v919 = vpack.c.b16 %v883, %v881
        %v920 = vpack.c.b16 %v884, %v882
        %v921 = vpack.c.b16 %v887, %v885
        %v922 = vpack.c.b16 %v888, %v886
        %v923 = vpack.c.b16 %v891, %v889
        %v924 = vpack.c.b16 %v892, %v890
        %957 = vmatprep.subr.bf16.mxu0 %v894
        %958 = vmatpush1.bf16.msra.mxu0 %v893
        %959 = vmatprep.subr.bf16.mxu0 %v896
        %960 = vmatpush1.bf16.msra.mxu0 %v895
        %961 = vmatprep.subr.bf16.mxu0 %v898
        %962 = vmatpush1.bf16.msra.mxu0 %v897
        %963 = vmatprep.subr.bf16.mxu0 %v900
        %964 = vmatpush1.bf16.msra.mxu0 %v899
        %965 = vmatprep.subr.bf16.mxu0 %v902
        %966 = vmatpush1.bf16.msra.mxu0 %v901
        %967 = vmatprep.subr.bf16.mxu0 %v904
        %968 = vmatpush1.bf16.msra.mxu0 %v903
        %969 = vmatprep.subr.bf16.mxu0 %v906
        %970 = vmatpush1.bf16.msra.mxu0 %v905
        %971 = vmatprep.subr.bf16.mxu0 %v908
        %972 = vmatpush1.bf16.msra.mxu0 %v907
        %973 = vmatprep.subr.bf16.mxu0 %v910
        %974 = vmatpush1.bf16.msra.mxu0 %v909
        %975 = vmatprep.subr.bf16.mxu0 %v912
        %976 = vmatpush1.bf16.msra.mxu0 %v911
        %977 = vmatprep.subr.bf16.mxu0 %v914
        %978 = vmatpush1.bf16.msra.mxu0 %v913
        %979 = vmatprep.subr.bf16.mxu0 %v916
        %980 = vmatpush1.bf16.msra.mxu0 %v915
        %981 = vmatprep.subr.bf16.mxu0 %v918
        %982 = vmatpush1.bf16.msra.mxu0 %v917
        %983 = vmatprep.subr.bf16.mxu0 %v920
        %984 = vmatpush1.bf16.msra.mxu0 %v919
        %985 = vmatprep.subr.bf16.mxu0 %v922
        %986 = vmatpush1.bf16.msra.mxu0 %v921
        %987 = vmatprep.subr.bf16.mxu0 %v924
        %988 = vmatpush1.bf16.msra.mxu0 %v923
        %989 = vmatprep.mubr.bf16.mxu0 %v461
        %990 = vmatmul.mubr.bf16.gmra.mrb[0].mxu0 %v460
        %v991 = vpop.f32.mrb[0].mxu0
        %v992 = vadd.f32 0.0, %v991
        %v993 = vpop.f32.mrb[0].mxu0
        %v994 = vadd.f32 0.0, %v993
        %v995 = vpop.f32.mrb[0].mxu0
        %v996 = vadd.f32 0.0, %v995
        %v997 = vpop.f32.mrb[0].mxu0
        %v998 = vadd.f32 0.0, %v997
        %999 = vmatprep.mubr.bf16.mxu0 %v463
        %1000 = vmatmul.mubr.bf16.gmra.mrb[0].mxu0 %v462
        %v1001 = vpop.f32.mrb[0].mxu0
        %v1002 = vadd.f32 0.0, %v1001
        %v1003 = vpop.f32.mrb[0].mxu0
        %v1004 = vadd.f32 0.0, %v1003
        %v1005 = vpop.f32.mrb[0].mxu0
        %v1006 = vadd.f32 0.0, %v1005
        %v1007 = vpop.f32.mrb[0].mxu0
        %v1008 = vadd.f32 0.0, %v1007
        %1009 = vmatprep.mubr.bf16.mxu0 %v465
        %1010 = vmatmul.mubr.bf16.gmra.mrb[0].mxu0 %v464
        %v1011 = vpop.f32.mrb[0].mxu0
        %v1012 = vadd.f32 0.0, %v1011
        %v1013 = vpop.f32.mrb[0].mxu0
        %v1014 = vadd.f32 0.0, %v1013
        %v1015 = vpop.f32.mrb[0].mxu0
        %v1016 = vadd.f32 0.0, %v1015
        %v1017 = vpop.f32.mrb[0].mxu0
        %v1018 = vadd.f32 0.0, %v1017
        %1019 = vmatprep.mubr.bf16.mxu0 %v467
        %1020 = vmatmul.mubr.bf16.gmra.mrb[0].mxu0 %v466
        %v1021 = vpop.f32.mrb[0].mxu0
        %v1022 = vadd.f32 0.0, %v1021
        %v1023 = vpop.f32.mrb[0].mxu0
        %v1024 = vadd.f32 0.0, %v1023
        %v1025 = vpop.f32.mrb[0].mxu0
        %v1026 = vadd.f32 0.0, %v1025
        %v1027 = vpop.f32.mrb[0].mxu0
        %v1028 = vadd.f32 0.0, %v1027
        %1029 = vmatprep.mubr.bf16.mxu0 %v469
        %1030 = vmatmul.mubr.bf16.gmra.mrb[0].mxu0 %v468
        %v1031 = vpop.f32.mrb[0].mxu0
        %v1032 = vadd.f32 0.0, %v1031
        %v1033 = vpop.f32.mrb[0].mxu0
        %v1034 = vadd.f32 0.0, %v1033
        %v1035 = vpop.f32.mrb[0].mxu0
        %v1036 = vadd.f32 0.0, %v1035
        %v1037 = vpop.f32.mrb[0].mxu0
        %v1038 = vadd.f32 0.0, %v1037
        %1039 = vmatprep.mubr.bf16.mxu0 %v471
        %1040 = vmatmul.mubr.bf16.gmra.mrb[0].mxu0 %v470
        %v1041 = vpop.f32.mrb[0].mxu0
        %v1042 = vadd.f32 0.0, %v1041
        %v1043 = vpop.f32.mrb[0].mxu0
        %v1044 = vadd.f32 0.0, %v1043
        %v1045 = vpop.f32.mrb[0].mxu0
        %v1046 = vadd.f32 0.0, %v1045
        %v1047 = vpop.f32.mrb[0].mxu0
        %v1048 = vadd.f32 0.0, %v1047
        %1049 = vmatprep.mubr.bf16.mxu0 %v473
        %1050 = vmatmul.mubr.bf16.gmra.mrb[0].mxu0 %v472
        %v1051 = vpop.f32.mrb[0].mxu0
        %v1052 = vadd.f32 0.0, %v1051
        %v1053 = vpop.f32.mrb[0].mxu0
        %v1054 = vadd.f32 0.0, %v1053
        %v1055 = vpop.f32.mrb[0].mxu0
        %v1056 = vadd.f32 0.0, %v1055
        %v1057 = vpop.f32.mrb[0].mxu0
        %v1058 = vadd.f32 0.0, %v1057
        %1059 = vmatprep.mubr.bf16.mxu0 %v475
        %1060 = vmatmul.mubr.bf16.gmra.mrb[0].mxu0 %v474
        %v1061 = vpop.f32.mrb[0].mxu0
        %v1062 = vadd.f32 0.0, %v1061
        %v1063 = vpop.f32.mrb[0].mxu0
        %v1064 = vadd.f32 0.0, %v1063
        %v1065 = vpop.f32.mrb[0].mxu0
        %v1066 = vadd.f32 0.0, %v1065
        %v1067 = vpop.f32.mrb[0].mxu0
        %v1068 = vadd.f32 0.0, %v1067
        %1069 = vdwg.mxu0
        %v1070 = vxor.u32 %v687, 2147483648
        %v1071 = vxor.u32 %v689, 2147483648
        %v1072 = vxor.u32 %v691, 2147483648
        %v1073 = vxor.u32 %v693, 2147483648
        %v1074 = vxor.u32 %v697, 2147483648
        %v1075 = vxor.u32 %v699, 2147483648
        %v1076 = vxor.u32 %v701, 2147483648
        %v1077 = vxor.u32 %v703, 2147483648
        %v1078 = vxor.u32 %v707, 2147483648
        %v1079 = vxor.u32 %v709, 2147483648
        %v1080 = vxor.u32 %v711, 2147483648
        %v1081 = vxor.u32 %v713, 2147483648
        %v1082 = vxor.u32 %v717, 2147483648
        %v1083 = vxor.u32 %v719, 2147483648
        %v1084 = vxor.u32 %v721, 2147483648
        %v1085 = vxor.u32 %v723, 2147483648
        %v1086 = vxor.u32 %v727, 2147483648
        %v1087 = vxor.u32 %v729, 2147483648
        %v1088 = vxor.u32 %v731, 2147483648
        %v1089 = vxor.u32 %v733, 2147483648
        %v1090 = vxor.u32 %v737, 2147483648
        %v1091 = vxor.u32 %v739, 2147483648
        %v1092 = vxor.u32 %v741, 2147483648
        %v1093 = vxor.u32 %v743, 2147483648
        %v1094 = vxor.u32 %v747, 2147483648
        %v1095 = vxor.u32 %v749, 2147483648
        %v1096 = vxor.u32 %v751, 2147483648
        %v1097 = vxor.u32 %v753, 2147483648
        %v1098 = vxor.u32 %v757, 2147483648
        %v1099 = vxor.u32 %v759, 2147483648
        %v1100 = vxor.u32 %v761, 2147483648
        %v1101 = vxor.u32 %v763, 2147483648
        %v1102 = vmul.f32 %v1070, 1.442695
        %v1103 = vpow.pop %v1102
        %v1104 = vmul.f32 %v1071, 1.442695
        %v1105 = vpow.pop %v1104
        %v1106 = vmul.f32 %v1072, 1.442695
        %v1107 = vpow.pop %v1106
        %v1108 = vmul.f32 %v1073, 1.442695
        %v1109 = vpow.pop %v1108
        %v1110 = vmul.f32 %v1074, 1.442695
        %v1111 = vpow.pop %v1110
        %v1112 = vmul.f32 %v1075, 1.442695
        %v1113 = vpow.pop %v1112
        %v1114 = vmul.f32 %v1076, 1.442695
        %v1115 = vpow.pop %v1114
        %v1116 = vmul.f32 %v1077, 1.442695
        %v1117 = vpow.pop %v1116
        %v1118 = vmul.f32 %v1078, 1.442695
        %v1119 = vpow.pop %v1118
        %v1120 = vmul.f32 %v1079, 1.442695
        %v1121 = vpow.pop %v1120
        %v1122 = vmul.f32 %v1080, 1.442695
        %v1123 = vpow.pop %v1122
        %v1124 = vmul.f32 %v1081, 1.442695
        %v1125 = vpow.pop %v1124
        %v1126 = vmul.f32 %v1082, 1.442695
        %v1127 = vpow.pop %v1126
        %v1128 = vmul.f32 %v1083, 1.442695
        %v1129 = vpow.pop %v1128
        %v1130 = vmul.f32 %v1084, 1.442695
        %v1131 = vpow.pop %v1130
        %v1132 = vmul.f32 %v1085, 1.442695
        %v1133 = vpow.pop %v1132
        %v1134 = vmul.f32 %v1086, 1.442695
        %v1135 = vpow.pop %v1134
        %v1136 = vmul.f32 %v1087, 1.442695
        %v1137 = vpow.pop %v1136
        %v1138 = vmul.f32 %v1088, 1.442695
        %v1139 = vpow.pop %v1138
        %v1140 = vmul.f32 %v1089, 1.442695
        %v1141 = vpow.pop %v1140
        %v1142 = vmul.f32 %v1090, 1.442695
        %v1143 = vpow.pop %v1142
        %v1144 = vmul.f32 %v1091, 1.442695
        %v1145 = vpow.pop %v1144
        %v1146 = vmul.f32 %v1092, 1.442695
        %v1147 = vpow.pop %v1146
        %v1148 = vmul.f32 %v1093, 1.442695
        %v1149 = vpow.pop %v1148
        %v1150 = vmul.f32 %v1094, 1.442695
        %v1151 = vpow.pop %v1150
        %v1152 = vmul.f32 %v1095, 1.442695
        %v1153 = vpow.pop %v1152
        %v1154 = vmul.f32 %v1096, 1.442695
        %v1155 = vpow.pop %v1154
        %v1156 = vmul.f32 %v1097, 1.442695
        %v1157 = vpow.pop %v1156
        %v1158 = vmul.f32 %v1098, 1.442695
        %v1159 = vpow.pop %v1158
        %v1160 = vmul.f32 %v1099, 1.442695
        %v1161 = vpow.pop %v1160
        %v1162 = vmul.f32 %v1100, 1.442695
        %v1163 = vpow.pop %v1162
        %v1164 = vmul.f32 %v1101, 1.442695
        %v1165 = vpow.pop %v1164
        %v1166 = vadd.f32 %v1103, 1.0
        %v1167 = vadd.f32 %v1105, 1.0
        %v1168 = vadd.f32 %v1107, 1.0
        %v1169 = vadd.f32 %v1109, 1.0
        %v1170 = vadd.f32 %v1111, 1.0
        %v1171 = vadd.f32 %v1113, 1.0
        %v1172 = vadd.f32 %v1115, 1.0
        %v1173 = vadd.f32 %v1117, 1.0
        %v1174 = vadd.f32 %v1119, 1.0
        %v1175 = vadd.f32 %v1121, 1.0
        %v1176 = vadd.f32 %v1123, 1.0
        %v1177 = vadd.f32 %v1125, 1.0
        %v1178 = vadd.f32 %v1127, 1.0
        %v1179 = vadd.f32 %v1129, 1.0
        %v1180 = vadd.f32 %v1131, 1.0
        %v1181 = vadd.f32 %v1133, 1.0
        %v1182 = vadd.f32 %v1135, 1.0
        %v1183 = vadd.f32 %v1137, 1.0
        %v1184 = vadd.f32 %v1139, 1.0
        %v1185 = vadd.f32 %v1141, 1.0
        %v1186 = vadd.f32 %v1143, 1.0
        %v1187 = vadd.f32 %v1145, 1.0
        %v1188 = vadd.f32 %v1147, 1.0
        %v1189 = vadd.f32 %v1149, 1.0
        %v1190 = vadd.f32 %v1151, 1.0
        %v1191 = vadd.f32 %v1153, 1.0
        %v1192 = vadd.f32 %v1155, 1.0
        %v1193 = vadd.f32 %v1157, 1.0
        %v1194 = vadd.f32 %v1159, 1.0
        %v1195 = vadd.f32 %v1161, 1.0
        %v1196 = vadd.f32 %v1163, 1.0
        %v1197 = vadd.f32 %v1165, 1.0
        %v1198 = vrcp.pop %v1166
        %v1199 = vmul.f32 1.0, %v1198
        %v1200 = vrcp.pop %v1167
        %v1201 = vmul.f32 1.0, %v1200
        %v1202 = vrcp.pop %v1168
        %v1203 = vmul.f32 1.0, %v1202
        %v1204 = vrcp.pop %v1169
        %v1205 = vmul.f32 1.0, %v1204
        %v1206 = vrcp.pop %v1170
        %v1207 = vmul.f32 1.0, %v1206
        %v1208 = vrcp.pop %v1171
        %v1209 = vmul.f32 1.0, %v1208
        %v1210 = vrcp.pop %v1172
        %v1211 = vmul.f32 1.0, %v1210
        %v1212 = vrcp.pop %v1173
        %v1213 = vmul.f32 1.0, %v1212
        %v1214 = vrcp.pop %v1174
        %v1215 = vmul.f32 1.0, %v1214
        %v1216 = vrcp.pop %v1175
        %v1217 = vmul.f32 1.0, %v1216
        %v1218 = vrcp.pop %v1176
        %v1219 = vmul.f32 1.0, %v1218
        %v1220 = vrcp.pop %v1177
        %v1221 = vmul.f32 1.0, %v1220
        %v1222 = vrcp.pop %v1178
        %v1223 = vmul.f32 1.0, %v1222
        %v1224 = vrcp.pop %v1179
        %v1225 = vmul.f32 1.0, %v1224
        %v1226 = vrcp.pop %v1180
        %v1227 = vmul.f32 1.0, %v1226
        %v1228 = vrcp.pop %v1181
        %v1229 = vmul.f32 1.0, %v1228
        %v1230 = vrcp.pop %v1182
        %v1231 = vmul.f32 1.0, %v1230
        %v1232 = vrcp.pop %v1183
        %v1233 = vmul.f32 1.0, %v1232
        %v1234 = vrcp.pop %v1184
        %v1235 = vmul.f32 1.0, %v1234
        %v1236 = vrcp.pop %v1185
        %v1237 = vmul.f32 1.0, %v1236
        %v1238 = vrcp.pop %v1186
        %v1239 = vmul.f32 1.0, %v1238
        %v1240 = vrcp.pop %v1187
        %v1241 = vmul.f32 1.0, %v1240
        %v1242 = vrcp.pop %v1188
        %v1243 = vmul.f32 1.0, %v1242
        %v1244 = vrcp.pop %v1189
        %v1245 = vmul.f32 1.0, %v1244
        %v1246 = vrcp.pop %v1190
        %v1247 = vmul.f32 1.0, %v1246
        %v1248 = vrcp.pop %v1191
        %v1249 = vmul.f32 1.0, %v1248
        %v1250 = vrcp.pop %v1192
        %v1251 = vmul.f32 1.0, %v1250
        %v1252 = vrcp.pop %v1193
        %v1253 = vmul.f32 1.0, %v1252
        %v1254 = vrcp.pop %v1194
        %v1255 = vmul.f32 1.0, %v1254
        %v1256 = vrcp.pop %v1195
        %v1257 = vmul.f32 1.0, %v1256
        %v1258 = vrcp.pop %v1196
        %v1259 = vmul.f32 1.0, %v1258
        %v1260 = vrcp.pop %v1197
        %v1261 = vmul.f32 1.0, %v1260
        %v1262 = vmul.f32 %v687, %v1199
        %v1263 = vmul.f32 %v689, %v1201
        %v1264 = vmul.f32 %v691, %v1203
        %v1265 = vmul.f32 %v693, %v1205
        %v1266 = vmul.f32 %v697, %v1207
        %v1267 = vmul.f32 %v699, %v1209
        %v1268 = vmul.f32 %v701, %v1211
        %v1269 = vmul.f32 %v703, %v1213
        %v1270 = vmul.f32 %v707, %v1215
        %v1271 = vmul.f32 %v709, %v1217
        %v1272 = vmul.f32 %v711, %v1219
        %v1273 = vmul.f32 %v713, %v1221
        %v1274 = vmul.f32 %v717, %v1223
        %v1275 = vmul.f32 %v719, %v1225
        %v1276 = vmul.f32 %v721, %v1227
        %v1277 = vmul.f32 %v723, %v1229
        %v1278 = vmul.f32 %v727, %v1231
        %v1279 = vmul.f32 %v729, %v1233
        %v1280 = vmul.f32 %v731, %v1235
        %v1281 = vmul.f32 %v733, %v1237
        %v1282 = vmul.f32 %v737, %v1239
        %v1283 = vmul.f32 %v739, %v1241
        %v1284 = vmul.f32 %v741, %v1243
        %v1285 = vmul.f32 %v743, %v1245
        %v1286 = vmul.f32 %v747, %v1247
        %v1287 = vmul.f32 %v749, %v1249
        %v1288 = vmul.f32 %v751, %v1251
        %v1289 = vmul.f32 %v753, %v1253
        %v1290 = vmul.f32 %v757, %v1255
        %v1291 = vmul.f32 %v759, %v1257
        %v1292 = vmul.f32 %v761, %v1259
        %v1293 = vmul.f32 %v763, %v1261
        %v1294 = vmul.f32 %v1262, %v992
        %v1295 = vmul.f32 %v1263, %v994
        %v1296 = vmul.f32 %v1264, %v996
        %v1297 = vmul.f32 %v1265, %v998
        %v1298 = vmul.f32 %v1266, %v1002
        %v1299 = vmul.f32 %v1267, %v1004
        %v1300 = vmul.f32 %v1268, %v1006
        %v1301 = vmul.f32 %v1269, %v1008
        %v1302 = vmul.f32 %v1270, %v1012
        %v1303 = vmul.f32 %v1271, %v1014
        %v1304 = vmul.f32 %v1272, %v1016
        %v1305 = vmul.f32 %v1273, %v1018
        %v1306 = vmul.f32 %v1274, %v1022
        %v1307 = vmul.f32 %v1275, %v1024
        %v1308 = vmul.f32 %v1276, %v1026
        %v1309 = vmul.f32 %v1277, %v1028
        %v1310 = vmul.f32 %v1278, %v1032
        %v1311 = vmul.f32 %v1279, %v1034
        %v1312 = vmul.f32 %v1280, %v1036
        %v1313 = vmul.f32 %v1281, %v1038
        %v1314 = vmul.f32 %v1282, %v1042
        %v1315 = vmul.f32 %v1283, %v1044
        %v1316 = vmul.f32 %v1284, %v1046
        %v1317 = vmul.f32 %v1285, %v1048
        %v1318 = vmul.f32 %v1286, %v1052
        %v1319 = vmul.f32 %v1287, %v1054
        %v1320 = vmul.f32 %v1288, %v1056
        %v1321 = vmul.f32 %v1289, %v1058
        %v1322 = vmul.f32 %v1290, %v1062
        %v1323 = vmul.f32 %v1291, %v1064
        %v1324 = vmul.f32 %v1292, %v1066
        %v1325 = vmul.f32 %v1293, %v1068
        %v1326 = vld [vmem:[#allocation2] sm:$0xff]
        %v1327 = vld [vmem:[#allocation2 + $0x8] sm:$0xff]
        %v1328 = vld [vmem:[#allocation2 + $0x10] sm:$0xff]
        %v1329 = vld [vmem:[#allocation2 + $0x18] sm:$0xff]
        %v1330 = vld [vmem:[#allocation2 + $0x20] sm:$0xff]
        %v1331 = vld [vmem:[#allocation2 + $0x28] sm:$0xff]
        %v1332 = vld [vmem:[#allocation2 + $0x30] sm:$0xff]
        %v1333 = vld [vmem:[#allocation2 + $0x38] sm:$0xff]
        %v1334 = vld [vmem:[#allocation2 + $0x40] sm:$0xff]
        %v1335 = vld [vmem:[#allocation2 + $0x48] sm:$0xff]
        %v1336 = vld [vmem:[#allocation2 + $0x50] sm:$0xff]
        %v1337 = vld [vmem:[#allocation2 + $0x58] sm:$0xff]
        %v1338 = vld [vmem:[#allocation2 + $0x60] sm:$0xff]
        %v1339 = vld [vmem:[#allocation2 + $0x68] sm:$0xff]
        %v1340 = vld [vmem:[#allocation2 + $0x70] sm:$0xff]
        %v1341 = vld [vmem:[#allocation2 + $0x78] sm:$0xff]
        %v1342 = vld [vmem:[#allocation2 + $0x80] sm:$0xff]
        %v1343 = vld [vmem:[#allocation2 + $0x88] sm:$0xff]
        %v1344 = vld [vmem:[#allocation2 + $0x90] sm:$0xff]
        %v1345 = vld [vmem:[#allocation2 + $0x98] sm:$0xff]
        %v1346 = vld [vmem:[#allocation2 + $0xa0] sm:$0xff]
        %v1347 = vld [vmem:[#allocation2 + $0xa8] sm:$0xff]
        %v1348 = vld [vmem:[#allocation2 + $0xb0] sm:$0xff]
        %v1349 = vld [vmem:[#allocation2 + $0xb8] sm:$0xff]
        %v1350 = vld [vmem:[#allocation2 + $0xc0] sm:$0xff]
        %v1351 = vld [vmem:[#allocation2 + $0xc8] sm:$0xff]
        %v1352 = vld [vmem:[#allocation2 + $0xd0] sm:$0xff]
        %v1353 = vld [vmem:[#allocation2 + $0xd8] sm:$0xff]
        %v1354 = vld [vmem:[#allocation2 + $0xe0] sm:$0xff]
        %v1355 = vld [vmem:[#allocation2 + $0xe8] sm:$0xff]
        %v1356 = vld [vmem:[#allocation2 + $0xf0] sm:$0xff]
        %v1357 = vld [vmem:[#allocation2 + $0xf8] sm:$0xff]
        %v1358 = vpack.c.bf16 %v1296, %v1294
        %v1359 = vpack.c.bf16 %v1297, %v1295
        %v1360 = vpack.c.bf16 %v1300, %v1298
        %v1361 = vpack.c.bf16 %v1301, %v1299
        %v1362 = vpack.c.bf16 %v1304, %v1302
        %v1363 = vpack.c.bf16 %v1305, %v1303
        %v1364 = vpack.c.bf16 %v1308, %v1306
        %v1365 = vpack.c.bf16 %v1309, %v1307
        %v1366 = vpack.c.bf16 %v1312, %v1310
        %v1367 = vpack.c.bf16 %v1313, %v1311
        %v1368 = vpack.c.bf16 %v1316, %v1314
        %v1369 = vpack.c.bf16 %v1317, %v1315
        %v1370 = vpack.c.bf16 %v1320, %v1318
        %v1371 = vpack.c.bf16 %v1321, %v1319
        %v1372 = vpack.c.bf16 %v1324, %v1322
        %v1373 = vpack.c.bf16 %v1325, %v1323
        %v1374 = vld [vmem:[%s293] sm:$0xff]
        %v1375 = vld [vmem:[%s293 + $0x8] sm:$0xff]
        %v1376 = vld [vmem:[%s293 + $0x10] sm:$0xff]
        %v1377 = vld [vmem:[%s293 + $0x18] sm:$0xff]
        %v1378 = vld [vmem:[%s293 + $0x20] sm:$0xff]
        %v1379 = vld [vmem:[%s293 + $0x28] sm:$0xff]
        %v1380 = vld [vmem:[%s293 + $0x30] sm:$0xff]
        %v1381 = vld [vmem:[%s293 + $0x38] sm:$0xff]
        %v1382 = vld [vmem:[%s293 + $0x40] sm:$0xff]
        %v1383 = vld [vmem:[%s293 + $0x48] sm:$0xff]
        %v1384 = vld [vmem:[%s293 + $0x50] sm:$0xff]
        %v1385 = vld [vmem:[%s293 + $0x58] sm:$0xff]
        %v1386 = vld [vmem:[%s293 + $0x60] sm:$0xff]
        %v1387 = vld [vmem:[%s293 + $0x68] sm:$0xff]
        %v1388 = vld [vmem:[%s293 + $0x70] sm:$0xff]
        %v1389 = vld [vmem:[%s293 + $0x78] sm:$0xff]
        %v1390 = vld [vmem:[%s293 + $0x80] sm:$0xff]
        %v1391 = vld [vmem:[%s293 + $0x88] sm:$0xff]
        %v1392 = vld [vmem:[%s293 + $0x90] sm:$0xff]
        %v1393 = vld [vmem:[%s293 + $0x98] sm:$0xff]
        %v1394 = vld [vmem:[%s293 + $0xa0] sm:$0xff]
        %v1395 = vld [vmem:[%s293 + $0xa8] sm:$0xff]
        %v1396 = vld [vmem:[%s293 + $0xb0] sm:$0xff]
        %v1397 = vld [vmem:[%s293 + $0xb8] sm:$0xff]
        %v1398 = vld [vmem:[%s293 + $0xc0] sm:$0xff]
        %v1399 = vld [vmem:[%s293 + $0xc8] sm:$0xff]
        %v1400 = vld [vmem:[%s293 + $0xd0] sm:$0xff]
        %v1401 = vld [vmem:[%s293 + $0xd8] sm:$0xff]
        %v1402 = vld [vmem:[%s293 + $0xe0] sm:$0xff]
        %v1403 = vld [vmem:[%s293 + $0xe8] sm:$0xff]
        %v1404 = vld [vmem:[%s293 + $0xf0] sm:$0xff]
        %v1405 = vld [vmem:[%s293 + $0xf8] sm:$0xff]
        %v1438 = vunpack.c.l.b16 %v1374
        %v1439 = vunpack.c.h.b16 %v1374
        %v1440 = vunpack.c.l.b16 %v1375
        %v1441 = vunpack.c.h.b16 %v1375
        %v1442 = vunpack.c.l.b16 %v1376
        %v1443 = vunpack.c.h.b16 %v1376
        %v1444 = vunpack.c.l.b16 %v1377
        %v1445 = vunpack.c.h.b16 %v1377
        %v1446 = vunpack.c.l.b16 %v1378
        %v1447 = vunpack.c.h.b16 %v1378
        %v1448 = vunpack.c.l.b16 %v1379
        %v1449 = vunpack.c.h.b16 %v1379
        %v1450 = vunpack.c.l.b16 %v1380
        %v1451 = vunpack.c.h.b16 %v1380
        %v1452 = vunpack.c.l.b16 %v1381
        %v1453 = vunpack.c.h.b16 %v1381
        %v1454 = vunpack.c.l.b16 %v1382
        %v1455 = vunpack.c.h.b16 %v1382
        %v1456 = vunpack.c.l.b16 %v1383
        %v1457 = vunpack.c.h.b16 %v1383
        %v1458 = vunpack.c.l.b16 %v1384
        %v1459 = vunpack.c.h.b16 %v1384
        %v1460 = vunpack.c.l.b16 %v1385
        %v1461 = vunpack.c.h.b16 %v1385
        %v1462 = vunpack.c.l.b16 %v1386
        %v1463 = vunpack.c.h.b16 %v1386
        %v1464 = vunpack.c.l.b16 %v1387
        %v1465 = vunpack.c.h.b16 %v1387
        %v1466 = vunpack.c.l.b16 %v1388
        %v1467 = vunpack.c.h.b16 %v1388
        %v1468 = vunpack.c.l.b16 %v1389
        %v1469 = vunpack.c.h.b16 %v1389
        %v1470 = vunpack.c.l.b16 %v1390
        %v1471 = vunpack.c.h.b16 %v1390
        %v1472 = vunpack.c.l.b16 %v1391
        %v1473 = vunpack.c.h.b16 %v1391
        %v1474 = vunpack.c.l.b16 %v1392
        %v1475 = vunpack.c.h.b16 %v1392
        %v1476 = vunpack.c.l.b16 %v1393
        %v1477 = vunpack.c.h.b16 %v1393
        %v1478 = vunpack.c.l.b16 %v1394
        %v1479 = vunpack.c.h.b16 %v1394
        %v1480 = vunpack.c.l.b16 %v1395
        %v1481 = vunpack.c.h.b16 %v1395
        %v1482 = vunpack.c.l.b16 %v1396
        %v1483 = vunpack.c.h.b16 %v1396
        %v1484 = vunpack.c.l.b16 %v1397
        %v1485 = vunpack.c.h.b16 %v1397
        %v1486 = vunpack.c.l.b16 %v1398
        %v1487 = vunpack.c.h.b16 %v1398
        %v1488 = vunpack.c.l.b16 %v1399
        %v1489 = vunpack.c.h.b16 %v1399
        %v1490 = vunpack.c.l.b16 %v1400
        %v1491 = vunpack.c.h.b16 %v1400
        %v1492 = vunpack.c.l.b16 %v1401
        %v1493 = vunpack.c.h.b16 %v1401
        %v1494 = vunpack.c.l.b16 %v1402
        %v1495 = vunpack.c.h.b16 %v1402
        %v1496 = vunpack.c.l.b16 %v1403
        %v1497 = vunpack.c.h.b16 %v1403
        %v1498 = vunpack.c.l.b16 %v1404
        %v1499 = vunpack.c.h.b16 %v1404
        %v1500 = vunpack.c.l.b16 %v1405
        %v1501 = vunpack.c.h.b16 %v1405
        %v1502 = vpack.c.b16 %v1440, %v1438
        %v1503 = vpack.c.b16 %v1441, %v1439
        %v1504 = vpack.c.b16 %v1444, %v1442
        %v1505 = vpack.c.b16 %v1445, %v1443
        %v1506 = vpack.c.b16 %v1448, %v1446
        %v1507 = vpack.c.b16 %v1449, %v1447
        %v1508 = vpack.c.b16 %v1452, %v1450
        %v1509 = vpack.c.b16 %v1453, %v1451
        %v1510 = vpack.c.b16 %v1456, %v1454
        %v1511 = vpack.c.b16 %v1457, %v1455
        %v1512 = vpack.c.b16 %v1460, %v1458
        %v1513 = vpack.c.b16 %v1461, %v1459
        %v1514 = vpack.c.b16 %v1464, %v1462
        %v1515 = vpack.c.b16 %v1465, %v1463
        %v1516 = vpack.c.b16 %v1468, %v1466
        %v1517 = vpack.c.b16 %v1469, %v1467
        %v1518 = vpack.c.b16 %v1472, %v1470
        %v1519 = vpack.c.b16 %v1473, %v1471
        %v1520 = vpack.c.b16 %v1476, %v1474
        %v1521 = vpack.c.b16 %v1477, %v1475
        %v1522 = vpack.c.b16 %v1480, %v1478
        %v1523 = vpack.c.b16 %v1481, %v1479
        %v1524 = vpack.c.b16 %v1484, %v1482
        %v1525 = vpack.c.b16 %v1485, %v1483
        %v1526 = vpack.c.b16 %v1488, %v1486
        %v1527 = vpack.c.b16 %v1489, %v1487
        %v1528 = vpack.c.b16 %v1492, %v1490
        %v1529 = vpack.c.b16 %v1493, %v1491
        %v1530 = vpack.c.b16 %v1496, %v1494
        %v1531 = vpack.c.b16 %v1497, %v1495
        %v1532 = vpack.c.b16 %v1500, %v1498
        %v1533 = vpack.c.b16 %v1501, %v1499
        %1566 = vmatprep.subr.bf16.mxu0 %v1503
        %1567 = vmatpush1.bf16.msra.mxu0 %v1502
        %1568 = vmatprep.subr.bf16.mxu0 %v1505
        %1569 = vmatpush1.bf16.msra.mxu0 %v1504
        %1570 = vmatprep.subr.bf16.mxu0 %v1507
        %1571 = vmatpush1.bf16.msra.mxu0 %v1506
        %1572 = vmatprep.subr.bf16.mxu0 %v1509
        %1573 = vmatpush1.bf16.msra.mxu0 %v1508
        %1574 = vmatprep.subr.bf16.mxu0 %v1511
        %1575 = vmatpush1.bf16.msra.mxu0 %v1510
        %1576 = vmatprep.subr.bf16.mxu0 %v1513
        %1577 = vmatpush1.bf16.msra.mxu0 %v1512
        %1578 = vmatprep.subr.bf16.mxu0 %v1515
        %1579 = vmatpush1.bf16.msra.mxu0 %v1514
        %1580 = vmatprep.subr.bf16.mxu0 %v1517
        %1581 = vmatpush1.bf16.msra.mxu0 %v1516
        %1582 = vmatprep.subr.bf16.mxu0 %v1519
        %1583 = vmatpush1.bf16.msra.mxu0 %v1518
        %1584 = vmatprep.subr.bf16.mxu0 %v1521
        %1585 = vmatpush1.bf16.msra.mxu0 %v1520
        %1586 = vmatprep.subr.bf16.mxu0 %v1523
        %1587 = vmatpush1.bf16.msra.mxu0 %v1522
        %1588 = vmatprep.subr.bf16.mxu0 %v1525
        %1589 = vmatpush1.bf16.msra.mxu0 %v1524
        %1590 = vmatprep.subr.bf16.mxu0 %v1527
        %1591 = vmatpush1.bf16.msra.mxu0 %v1526
        %1592 = vmatprep.subr.bf16.mxu0 %v1529
        %1593 = vmatpush1.bf16.msra.mxu0 %v1528
        %1594 = vmatprep.subr.bf16.mxu0 %v1531
        %1595 = vmatpush1.bf16.msra.mxu0 %v1530
        %1596 = vmatprep.subr.bf16.mxu0 %v1533
        %1597 = vmatpush1.bf16.msra.mxu0 %v1532
        %1598 = vmatprep.mubr.bf16.mxu0 %v1359
        %1599 = vmatmul.mubr.bf16.gmra.mrb[0].mxu0 %v1358
        %v1600 = vpop.f32.mrb[0].mxu0
        %v1601 = vadd.f32 0.0, %v1600
        %v1602 = vpop.f32.mrb[0].mxu0
        %v1603 = vadd.f32 0.0, %v1602
        %v1604 = vpop.f32.mrb[0].mxu0
        %v1605 = vadd.f32 0.0, %v1604
        %v1606 = vpop.f32.mrb[0].mxu0
        %v1607 = vadd.f32 0.0, %v1606
        %1608 = vmatprep.mubr.bf16.mxu0 %v1361
        %1609 = vmatmul.mubr.bf16.gmra.mrb[0].mxu0 %v1360
        %v1610 = vpop.f32.mrb[0].mxu0
        %v1611 = vadd.f32 0.0, %v1610
        %v1612 = vpop.f32.mrb[0].mxu0
        %v1613 = vadd.f32 0.0, %v1612
        %v1614 = vpop.f32.mrb[0].mxu0
        %v1615 = vadd.f32 0.0, %v1614
        %v1616 = vpop.f32.mrb[0].mxu0
        %v1617 = vadd.f32 0.0, %v1616
        %1618 = vmatprep.mubr.bf16.mxu0 %v1363
        %1619 = vmatmul.mubr.bf16.gmra.mrb[0].mxu0 %v1362
        %v1620 = vpop.f32.mrb[0].mxu0
        %v1621 = vadd.f32 0.0, %v1620
        %v1622 = vpop.f32.mrb[0].mxu0
        %v1623 = vadd.f32 0.0, %v1622
        %v1624 = vpop.f32.mrb[0].mxu0
        %v1625 = vadd.f32 0.0, %v1624
        %v1626 = vpop.f32.mrb[0].mxu0
        %v1627 = vadd.f32 0.0, %v1626
        %1628 = vmatprep.mubr.bf16.mxu0 %v1365
        %1629 = vmatmul.mubr.bf16.gmra.mrb[0].mxu0 %v1364
        %v1630 = vpop.f32.mrb[0].mxu0
        %v1631 = vadd.f32 0.0, %v1630
        %v1632 = vpop.f32.mrb[0].mxu0
        %v1633 = vadd.f32 0.0, %v1632
        %v1634 = vpop.f32.mrb[0].mxu0
        %v1635 = vadd.f32 0.0, %v1634
        %v1636 = vpop.f32.mrb[0].mxu0
        %v1637 = vadd.f32 0.0, %v1636
        %1638 = vmatprep.mubr.bf16.mxu0 %v1367
        %1639 = vmatmul.mubr.bf16.gmra.mrb[0].mxu0 %v1366
        %v1640 = vpop.f32.mrb[0].mxu0
        %v1641 = vadd.f32 0.0, %v1640
        %v1642 = vpop.f32.mrb[0].mxu0
        %v1643 = vadd.f32 0.0, %v1642
        %v1644 = vpop.f32.mrb[0].mxu0
        %v1645 = vadd.f32 0.0, %v1644
        %v1646 = vpop.f32.mrb[0].mxu0
        %v1647 = vadd.f32 0.0, %v1646
        %1648 = vmatprep.mubr.bf16.mxu0 %v1369
        %1649 = vmatmul.mubr.bf16.gmra.mrb[0].mxu0 %v1368
        %v1650 = vpop.f32.mrb[0].mxu0
        %v1651 = vadd.f32 0.0, %v1650
        %v1652 = vpop.f32.mrb[0].mxu0
        %v1653 = vadd.f32 0.0, %v1652
        %v1654 = vpop.f32.mrb[0].mxu0
        %v1655 = vadd.f32 0.0, %v1654
        %v1656 = vpop.f32.mrb[0].mxu0
        %v1657 = vadd.f32 0.0, %v1656
        %1658 = vmatprep.mubr.bf16.mxu0 %v1371
        %1659 = vmatmul.mubr.bf16.gmra.mrb[0].mxu0 %v1370
        %v1660 = vpop.f32.mrb[0].mxu0
        %v1661 = vadd.f32 0.0, %v1660
        %v1662 = vpop.f32.mrb[0].mxu0
        %v1663 = vadd.f32 0.0, %v1662
        %v1664 = vpop.f32.mrb[0].mxu0
        %v1665 = vadd.f32 0.0, %v1664
        %v1666 = vpop.f32.mrb[0].mxu0
        %v1667 = vadd.f32 0.0, %v1666
        %1668 = vmatprep.mubr.bf16.mxu0 %v1373
        %1669 = vmatmul.mubr.bf16.gmra.mrb[0].mxu0 %v1372
        %v1670 = vpop.f32.mrb[0].mxu0
        %v1671 = vadd.f32 0.0, %v1670
        %v1672 = vpop.f32.mrb[0].mxu0
        %v1673 = vadd.f32 0.0, %v1672
        %v1674 = vpop.f32.mrb[0].mxu0
        %v1675 = vadd.f32 0.0, %v1674
        %v1676 = vpop.f32.mrb[0].mxu0
        %v1677 = vadd.f32 0.0, %v1676
        %1678 = vdwg.mxu0
        %v1679 = vadd.f32 %v1326, %v1601
        %v1680 = vadd.f32 %v1327, %v1603
        %v1681 = vadd.f32 %v1328, %v1605
        %v1682 = vadd.f32 %v1329, %v1607
        %v1683 = vadd.f32 %v1330, %v1611
        %v1684 = vadd.f32 %v1331, %v1613
        %v1685 = vadd.f32 %v1332, %v1615
        %v1686 = vadd.f32 %v1333, %v1617
        %v1687 = vadd.f32 %v1334, %v1621
        %v1688 = vadd.f32 %v1335, %v1623
        %v1689 = vadd.f32 %v1336, %v1625
        %v1690 = vadd.f32 %v1337, %v1627
        %v1691 = vadd.f32 %v1338, %v1631
        %v1692 = vadd.f32 %v1339, %v1633
        %v1693 = vadd.f32 %v1340, %v1635
        %v1694 = vadd.f32 %v1341, %v1637
        %v1695 = vadd.f32 %v1342, %v1641
        %v1696 = vadd.f32 %v1343, %v1643
        %v1697 = vadd.f32 %v1344, %v1645
        %v1698 = vadd.f32 %v1345, %v1647
        %v1699 = vadd.f32 %v1346, %v1651
        %v1700 = vadd.f32 %v1347, %v1653
        %v1701 = vadd.f32 %v1348, %v1655
        %v1702 = vadd.f32 %v1349, %v1657
        %v1703 = vadd.f32 %v1350, %v1661
        %v1704 = vadd.f32 %v1351, %v1663
        %v1705 = vadd.f32 %v1352, %v1665
        %v1706 = vadd.f32 %v1353, %v1667
        %v1707 = vadd.f32 %v1354, %v1671
        %v1708 = vadd.f32 %v1355, %v1673
        %v1709 = vadd.f32 %v1356, %v1675
        %v1710 = vadd.f32 %v1357, %v1677
        %1711 = vst [vmem:[#allocation2] sm:$0xff] %v1679
        %1712 = vst [vmem:[#allocation2 + $0x8] sm:$0xff] %v1680
        %1713 = vst [vmem:[#allocation2 + $0x10] sm:$0xff] %v1681
        %1714 = vst [vmem:[#allocation2 + $0x18] sm:$0xff] %v1682
        %1715 = vst [vmem:[#allocation2 + $0x20] sm:$0xff] %v1683
        %1716 = vst [vmem:[#allocation2 + $0x28] sm:$0xff] %v1684
        %1717 = vst [vmem:[#allocation2 + $0x30] sm:$0xff] %v1685
        %1718 = vst [vmem:[#allocation2 + $0x38] sm:$0xff] %v1686
        %1719 = vst [vmem:[#allocation2 + $0x40] sm:$0xff] %v1687
        %1720 = vst [vmem:[#allocation2 + $0x48] sm:$0xff] %v1688
        %1721 = vst [vmem:[#allocation2 + $0x50] sm:$0xff] %v1689
        %1722 = vst [vmem:[#allocation2 + $0x58] sm:$0xff] %v1690
        %1723 = vst [vmem:[#allocation2 + $0x60] sm:$0xff] %v1691
        %1724 = vst [vmem:[#allocation2 + $0x68] sm:$0xff] %v1692
        %1725 = vst [vmem:[#allocation2 + $0x70] sm:$0xff] %v1693
        %1726 = vst [vmem:[#allocation2 + $0x78] sm:$0xff] %v1694
        %1727 = vst [vmem:[#allocation2 + $0x80] sm:$0xff] %v1695
        %1728 = vst [vmem:[#allocation2 + $0x88] sm:$0xff] %v1696
        %1729 = vst [vmem:[#allocation2 + $0x90] sm:$0xff] %v1697
        %1730 = vst [vmem:[#allocation2 + $0x98] sm:$0xff] %v1698
        %1731 = vst [vmem:[#allocation2 + $0xa0] sm:$0xff] %v1699
        %1732 = vst [vmem:[#allocation2 + $0xa8] sm:$0xff] %v1700
        %1733 = vst [vmem:[#allocation2 + $0xb0] sm:$0xff] %v1701
        %1734 = vst [vmem:[#allocation2 + $0xb8] sm:$0xff] %v1702
        %1735 = vst [vmem:[#allocation2 + $0xc0] sm:$0xff] %v1703
        %1736 = vst [vmem:[#allocation2 + $0xc8] sm:$0xff] %v1704
        %1737 = vst [vmem:[#allocation2 + $0xd0] sm:$0xff] %v1705
        %1738 = vst [vmem:[#allocation2 + $0xd8] sm:$0xff] %v1706
        %1739 = vst [vmem:[#allocation2 + $0xe0] sm:$0xff] %v1707
        %1740 = vst [vmem:[#allocation2 + $0xe8] sm:$0xff] %v1708
        %1741 = vst [vmem:[#allocation2 + $0xf0] sm:$0xff] %v1709
        %1742 = vst [vmem:[#allocation2 + $0xf8] sm:$0xff] %v1710
        %p1743 = scmp.eq.s32.totalorder %s28, 1
        // Predicated region
        $region57: #{tpu_custom_call.1} parent=35 // pred_check
          %p1744 = pneg %p1743
        $region58: #{tpu_custom_call.1} parent=35 // pred_check_branch
          %1746 = sbr.rel (%p1744) target = $region60
        $region59: #{tpu_custom_call.1} parent=35 // pred_region
          %v1747 = vld [vmem:[#allocation2] sm:$0xff]
          %v1748 = vld [vmem:[#allocation2 + $0x8] sm:$0xff]
          %v1749 = vld [vmem:[#allocation2 + $0x10] sm:$0xff]
          %v1750 = vld [vmem:[#allocation2 + $0x18] sm:$0xff]
          %v1751 = vld [vmem:[#allocation2 + $0x20] sm:$0xff]
          %v1752 = vld [vmem:[#allocation2 + $0x28] sm:$0xff]
          %v1753 = vld [vmem:[#allocation2 + $0x30] sm:$0xff]
          %v1754 = vld [vmem:[#allocation2 + $0x38] sm:$0xff]
          %v1755 = vld [vmem:[#allocation2 + $0x40] sm:$0xff]
          %v1756 = vld [vmem:[#allocation2 + $0x48] sm:$0xff]
          %v1757 = vld [vmem:[#allocation2 + $0x50] sm:$0xff]
          %v1758 = vld [vmem:[#allocation2 + $0x58] sm:$0xff]
          %v1759 = vld [vmem:[#allocation2 + $0x60] sm:$0xff]
          %v1760 = vld [vmem:[#allocation2 + $0x68] sm:$0xff]
          %v1761 = vld [vmem:[#allocation2 + $0x70] sm:$0xff]
          %v1762 = vld [vmem:[#allocation2 + $0x78] sm:$0xff]
          %v1763 = vld [vmem:[#allocation2 + $0x80] sm:$0xff]
          %v1764 = vld [vmem:[#allocation2 + $0x88] sm:$0xff]
          %v1765 = vld [vmem:[#allocation2 + $0x90] sm:$0xff]
          %v1766 = vld [vmem:[#allocation2 + $0x98] sm:$0xff]
          %v1767 = vld [vmem:[#allocation2 + $0xa0] sm:$0xff]
          %v1768 = vld [vmem:[#allocation2 + $0xa8] sm:$0xff]
          %v1769 = vld [vmem:[#allocation2 + $0xb0] sm:$0xff]
          %v1770 = vld [vmem:[#allocation2 + $0xb8] sm:$0xff]
          %v1771 = vld [vmem:[#allocation2 + $0xc0] sm:$0xff]
          %v1772 = vld [vmem:[#allocation2 + $0xc8] sm:$0xff]
          %v1773 = vld [vmem:[#allocation2 + $0xd0] sm:$0xff]
          %v1774 = vld [vmem:[#allocation2 + $0xd8] sm:$0xff]
          %v1775 = vld [vmem:[#allocation2 + $0xe0] sm:$0xff]
          %v1776 = vld [vmem:[#allocation2 + $0xe8] sm:$0xff]
          %v1777 = vld [vmem:[#allocation2 + $0xf0] sm:$0xff]
          %v1778 = vld [vmem:[#allocation2 + $0xf8] sm:$0xff]
          %v1779 = vpack.c.bf16 %v1749, %v1747
          %v1780 = vpack.c.bf16 %v1750, %v1748
          %v1781 = vpack.c.bf16 %v1753, %v1751
          %v1782 = vpack.c.bf16 %v1754, %v1752
          %v1783 = vpack.c.bf16 %v1757, %v1755
          %v1784 = vpack.c.bf16 %v1758, %v1756
          %v1785 = vpack.c.bf16 %v1761, %v1759
          %v1786 = vpack.c.bf16 %v1762, %v1760
          %v1787 = vpack.c.bf16 %v1765, %v1763
          %v1788 = vpack.c.bf16 %v1766, %v1764
          %v1789 = vpack.c.bf16 %v1769, %v1767
          %v1790 = vpack.c.bf16 %v1770, %v1768
          %v1791 = vpack.c.bf16 %v1773, %v1771
          %v1792 = vpack.c.bf16 %v1774, %v1772
          %v1793 = vpack.c.bf16 %v1777, %v1775
          %v1794 = vpack.c.bf16 %v1778, %v1776
          %v1811 = vunpack.c.l.b16 %v1779
          %v1812 = vunpack.c.l.b16 %v1780
          %v1813 = vunpack.c.h.b16 %v1779
          %v1814 = vunpack.c.h.b16 %v1780
          %v1815 = vunpack.c.l.b16 %v1781
          %v1816 = vunpack.c.l.b16 %v1782
          %v1817 = vunpack.c.h.b16 %v1781
          %v1818 = vunpack.c.h.b16 %v1782
          %v1819 = vunpack.c.l.b16 %v1783
          %v1820 = vunpack.c.l.b16 %v1784
          %v1821 = vunpack.c.h.b16 %v1783
          %v1822 = vunpack.c.h.b16 %v1784
          %v1823 = vunpack.c.l.b16 %v1785
          %v1824 = vunpack.c.l.b16 %v1786
          %v1825 = vunpack.c.h.b16 %v1785
          %v1826 = vunpack.c.h.b16 %v1786
          %v1827 = vunpack.c.l.b16 %v1787
          %v1828 = vunpack.c.l.b16 %v1788
          %v1829 = vunpack.c.h.b16 %v1787
          %v1830 = vunpack.c.h.b16 %v1788
          %v1831 = vunpack.c.l.b16 %v1789
          %v1832 = vunpack.c.l.b16 %v1790
          %v1833 = vunpack.c.h.b16 %v1789
          %v1834 = vunpack.c.h.b16 %v1790
          %v1835 = vunpack.c.l.b16 %v1791
          %v1836 = vunpack.c.l.b16 %v1792
          %v1837 = vunpack.c.h.b16 %v1791
          %v1838 = vunpack.c.h.b16 %v1792
          %v1839 = vunpack.c.l.b16 %v1793
          %v1840 = vunpack.c.l.b16 %v1794
          %v1841 = vunpack.c.h.b16 %v1793
          %v1842 = vunpack.c.h.b16 %v1794
          %v1843 = vpack.c.b16 %v1812, %v1811
          %v1844 = vpack.c.b16 %v1814, %v1813
          %v1845 = vpack.c.b16 %v1816, %v1815
          %v1846 = vpack.c.b16 %v1818, %v1817
          %v1847 = vpack.c.b16 %v1820, %v1819
          %v1848 = vpack.c.b16 %v1822, %v1821
          %v1849 = vpack.c.b16 %v1824, %v1823
          %v1850 = vpack.c.b16 %v1826, %v1825
          %v1851 = vpack.c.b16 %v1828, %v1827
          %v1852 = vpack.c.b16 %v1830, %v1829
          %v1853 = vpack.c.b16 %v1832, %v1831
          %v1854 = vpack.c.b16 %v1834, %v1833
          %v1855 = vpack.c.b16 %v1836, %v1835
          %v1856 = vpack.c.b16 %v1838, %v1837
          %v1857 = vpack.c.b16 %v1840, %v1839
          %v1858 = vpack.c.b16 %v1842, %v1841
          %1875 = vst [vmem:[#allocation11] sm:$0xff] %v1843
          %1876 = vst [vmem:[#allocation11 + $0x8] sm:$0xff] %v1844
          %1877 = vst [vmem:[#allocation11 + $0x10] sm:$0xff] %v1845
          %1878 = vst [vmem:[#allocation11 + $0x18] sm:$0xff] %v1846
          %1879 = vst [vmem:[#allocation11 + $0x20] sm:$0xff] %v1847
          %1880 = vst [vmem:[#allocation11 + $0x28] sm:$0xff] %v1848
          %1881 = vst [vmem:[#allocation11 + $0x30] sm:$0xff] %v1849
          %1882 = vst [vmem:[#allocation11 + $0x38] sm:$0xff] %v1850
          %1883 = vst [vmem:[#allocation11 + $0x40] sm:$0xff] %v1851
          %1884 = vst [vmem:[#allocation11 + $0x48] sm:$0xff] %v1852
          %1885 = vst [vmem:[#allocation11 + $0x50] sm:$0xff] %v1853
          %1886 = vst [vmem:[#allocation11 + $0x58] sm:$0xff] %v1854
          %1887 = vst [vmem:[#allocation11 + $0x60] sm:$0xff] %v1855
          %1888 = vst [vmem:[#allocation11 + $0x68] sm:$0xff] %v1856
          %1889 = vst [vmem:[#allocation11 + $0x70] sm:$0xff] %v1857
          %1890 = vst [vmem:[#allocation11 + $0x78] sm:$0xff] %v1858
        $region60: #{tpu_custom_call.1} parent=35 // pred_fallthru
          _
        // Predicated region
        $region61: #{tpu_custom_call.1} parent=35 // pred_check
          %p1891 = pneg %p157
        $region62: #{tpu_custom_call.1} parent=35 // pred_check_branch
          %1893 = sbr.rel (%p1891) target = $region64
        $region63: #{tpu_custom_call.1} parent=35 // pred_region
          %s1894 = smul.u32 16, %s27
          %s1896 = ssub.s32 2048, 2048
          %1897 = vsyncadd [#allocation5], %s1896
          %s1898 = smul.addr %s1894, 2
          %s1899 = smul.addr %s1898, 64
          %s1900 = scalar_lea.hbm %s4, %s1899
          %s1901 = sshll.u32 [#allocation11], 4
          %s1902 = int_to_ptr.vmem [resolvable:$true] %s1901
          %1907 = dma.vmem_to_hbm [thread:$0]  %s1902, 2048, %s1900, [#allocation5], 128, 128, 8
        $region64: #{tpu_custom_call.1} parent=35 // pred_fallthru
          _
        // Predicated region
        $region65: #{tpu_custom_call.1} parent=35 // pred_check
          %p1908 = pneg %p157
        $region66: #{tpu_custom_call.1} parent=35 // pred_check_branch
          %1910 = sbr.rel (%p1908) target = $region68
        $region67: #{tpu_custom_call.1} parent=35 // pred_region
          %1911 = dma.done [#allocation5], 2048
        $region68: #{tpu_custom_call.1} parent=35 // pred_fallthru
          _
      $region36: #{tpu_custom_call.1} parent=5 // pred_fallthru
        _
      %p1912 = scmp.le.s32.totalorder 2, %s18
      // Predicated region
      $region69: #{tpu_custom_call.1} parent=5 // pred_check
        %p1913 = pneg %p1912
      $region70: #{tpu_custom_call.1} parent=5 // pred_check_branch
        %1915 = sbr.rel (%p1913) target = $region72
      $region71: #{tpu_custom_call.1} parent=5 // pred_region
        %s1916 = ssub.s32 %s18, 2
      $region72: #{tpu_custom_call.1} parent=5 // pred_fallthru
        _
    $region6: #{tpu_custom_call.1} parent=1 // loop_footer
      %s22 = sadd.s32 1, %s18
    $region7: #{tpu_custom_call.1} parent=1 // loop_footer_branch
      %17 = sbr.rel target = $region3
    $region8: #{tpu_custom_call.1} parent=1 // loop_exit
      _
    %1917 = vsyncpa [#allocation4], 1
    %s1918 = scalar_lea.sflag [#allocation4], 1
    %1919 = vsyncpa %s1918, 1
    %1920 = vsyncpa [#allocation7], 1
    %s1921 = scalar_lea.sflag [#allocation7], 1
    %1922 = vsyncpa %s1921, 1
    %1923 = vsyncpa [#allocation10], 1
    %s1924 = scalar_lea.sflag [#allocation10], 1
    %1925 = vsyncpa %s1924, 1
    %1926 = vsyncpa [#allocation5], 1
    %s1927 = scalar_lea.sflag [#allocation5], 1
    %1928 = vsyncpa %s1927, 1

</llo_original>
